<compile_context>
chip_gen: v6e
topology: v6e:2x2x1
jax: 0.10.0
libtpu: 0.0.40
codegen_flags: <defaults>
</compile_context>

<pallas_src>
import math
import functools

import jax
import jax.numpy as jnp
from jax.experimental import pallas as pl
from jax.experimental.pallas import tpu as pltpu


def _tensorcores_per_chip():
    """Best-effort TensorCore count per chip; default 1 (v5e/v6e)."""
    try:
        info = pltpu.get_tpu_info()
        for name in ("tensorcores_per_chip", "num_tensorcores", "cores_per_chip"):
            v = getattr(info, name, None)
            if isinstance(v, int) and v >= 1:
                return v
    except Exception:
        pass
    try:
        kind = jax.devices()[0].device_kind.lower()
    except Exception:
        return 1
    # Megacore / dual-TC generations (v4, v5p, v7x); 'lite'/v5e/v6e are single-TC.
    if ("lite" not in kind and "v5e" not in kind and "v6e" not in kind
            and any(t in kind for t in ("v4", "v5", "v7"))):
        return 2
    return 1


def _encoder_layer_kernel(x_ref, keep_ref, hmask_ref,
                          fcw_ref, fcb_ref, ln1w_ref, ln1b_ref,
                          w1_ref, b1_ref, w2_ref, b2_ref,
                          ln2w_ref, ln2b_ref,
                          o_ref, acc_ref, *,
                          num_heads, seq_len, embed_size, batch_block):
    H, L, E, NB = num_heads, seq_len, embed_size, batch_block
    R = NB * L
    layer = pl.program_id(1)
    scale = 1.0 / math.sqrt(float(E))      # module scales by sqrt(embed_size), not head_dim
    neg = jnp.float32(-1e3 * scale)        # masked_fill(-1e3) applied before the /sqrt(E)

    # Layer 0: seed the VMEM-resident activation carry with the input block.
    @pl.when(layer == 0)
    def _():
        acc_ref[...] = x_ref[...]

    x = acc_ref[...]                       # (NB, L, E) f32, carried across the layer axis

    # Compact int8 keep mask -> f32 compare at the point of use (one per layer step).
    keepf = keep_ref[...].astype(jnp.float32)                       # (NB, L, L)
    keep_bh = jnp.broadcast_to(keepf[:, None, :, :],
                               (NB, H, L, L)).reshape(NB * H, L, L)
    hmask = hmask_ref[...]                                          # (H, E)

    def layer_norm(y, w, b):               # y: (R, E), w/b: (1, E); eps matches torch 1e-5
        mu = jnp.mean(y, axis=-1, keepdims=True)
        yc = y - mu
        var = jnp.mean(yc * yc, axis=-1, keepdims=True)
        return yc * jax.lax.rsqrt(var + 1e-5) * w + b

    # ---- masked multi-head self-attention (q = k = v = x, no in-projection) ----------
    # Head-masked K/V: zero every other head's feature columns so a full-E contraction
    # equals the per-head D-wide contraction (no per-head loop, no lane slicing).
    kv = (jnp.broadcast_to(x[:, None, :, :], (NB, H, L, E)) * hmask[None, :, None, :]
          ).reshape(NB * H, L, E)
    qs = jnp.broadcast_to((x * scale)[:, None, :, :],
                          (NB, H, L, E)).reshape(NB * H, L, E)
    kv_b = kv.astype(jnp.bfloat16)                                  # bf16 at the MXU
    qs_b = qs.astype(jnp.bfloat16)

    energy = jnp.einsum('bqe,bke->bqk', qs_b, kv_b,
                        preferred_element_type=jnp.float32)         # (NB*H, L, L) f32
    energy = jnp.where(keep_bh != 0, energy, neg)

    m = jnp.max(energy, axis=-1, keepdims=True)
    p = jnp.exp(energy - m)
    s = jnp.sum(p, axis=-1, keepdims=True)
    attn = p * pl.reciprocal(s, approx=True)                        # EUP reciprocal

    ctx_h = jnp.einsum('bqk,bke->bqe', attn.astype(jnp.bfloat16), kv_b,
                       preferred_element_type=jnp.float32)          # (NB*H, L, E) f32
    # Each head's output lives in its own disjoint feature columns, so summing over the
    # head axis interleaves them back into (NB, L, E) with no concatenate.  Unrolled adds
    # (H=4) are statically identical to a reduce and proven to lower cleanly.
    ctx4 = ctx_h.reshape(NB, H, L, E)
    ctx = ctx4[:, 0]
    for hh in range(1, H):
        ctx = ctx + ctx4[:, hh]
    ctx = ctx.reshape(R, E)

    xr = x.reshape(R, E)
    att_out = jnp.dot(ctx.astype(jnp.bfloat16), fcw_ref[0],
                      preferred_element_type=jnp.float32) + fcb_ref[0]

    # ---- residual + LayerNorm + FFN + residual + LayerNorm (dropout = identity) ------
    h1 = layer_norm(att_out + xr, ln1w_ref[0], ln1b_ref[0])         # (R, E) f32
    f = jnp.dot(h1.astype(jnp.bfloat16), w1_ref[0],
                preferred_element_type=jnp.float32) + b1_ref[0]
    f = jnp.maximum(f, 0.0)
    f = jnp.dot(f.astype(jnp.bfloat16), w2_ref[0],
                preferred_element_type=jnp.float32) + b2_ref[0]
    new_x = layer_norm(f + h1, ln2w_ref[0], ln2b_ref[0]).reshape(NB, L, E)

    acc_ref[...] = new_x                   # carry to the next layer grid step

    @pl.when(layer == pl.num_programs(1) - 1)
    def _():
        o_ref[...] = new_x.astype(o_ref.dtype)


def transformer_encoder(x, params, *, num_heads,
                        attn_mask=None, key_padding_mask=None):
    """x: (N, L, E) f32. attn_mask: (L, L), 1=keep / 0=mask (broadcast over batch & heads).
    key_padding_mask: (N, L), 1=keep / 0=pad (masks key positions)."""
    N, L, E = x.shape
    H = num_heads
    D = E // H
    num_layers = params["fc_out_w"].shape[0]
    FE = params["ffn1_w"].shape[1]

    # Compact combined keep-mask (N, L, L) int8: positions with 0 get masked_fill(-1e3).
    keep = jnp.ones((N, L, L), jnp.int8)
    if attn_mask is not None:
        keep = keep * (attn_mask != 0).astype(jnp.int8)[None, :, :]
    if key_padding_mask is not None:
        keep = keep * (key_padding_mask != 0).astype(jnp.int8)[:, None, :]

    # Head-selector masks: row h is 1 on feature columns [h*D, (h+1)*D).
    hmask = (jnp.arange(E)[None, :] // D == jnp.arange(H)[:, None]).astype(jnp.float32)

    # Pre-transpose matmul weights (free in XLA) and store bf16 (MXU inputs, half VMEM).
    fcw_t = jnp.swapaxes(params["fc_out_w"], 1, 2).astype(jnp.bfloat16)   # (Ln, E, E)
    w1_t = jnp.swapaxes(params["ffn1_w"], 1, 2).astype(jnp.bfloat16)      # (Ln, E, FE)
    w2_t = jnp.swapaxes(params["ffn2_w"], 1, 2).astype(jnp.bfloat16)      # (Ln, FE, E)
    fcb = params["fc_out_b"].reshape(num_layers, 1, E).astype(jnp.float32)
    b1 = params["ffn1_b"].reshape(num_layers, 1, FE).astype(jnp.float32)
    b2 = params["ffn2_b"].reshape(num_layers, 1, E).astype(jnp.float32)
    ln1w = params["ln1_w"].reshape(num_layers, 1, E).astype(jnp.float32)
    ln1b = params["ln1_b"].reshape(num_layers, 1, E).astype(jnp.float32)
    ln2w = params["ln2_w"].reshape(num_layers, 1, E).astype(jnp.float32)
    ln2b = params["ln2_b"].reshape(num_layers, 1, E).astype(jnp.float32)

    # Split the batch only when the chip actually has >= 2 TensorCores; on single-TC
    # chips (v5e/v6e) a split is a pure serial loop that halves matmul M for nothing.
    num_blocks = 2 if (_tensorcores_per_chip() >= 2 and N >= 2 and N % 2 == 0) else 1
    nb = N // num_blocks

    # VMEM budget: 2 layers of streamed weights (double-buffered) + activation blocks
    # + rough peak f32 intermediates, with generous headroom; clamped to [16, 64] MiB
    # so it is valid on every generation (v7x has only 64 MiB per TC).
    w_layer = 2 * (E * E + 2 * E * FE) + 4 * (6 * E + FE)
    act = 4 * nb * L * E * 5 + nb * L * L            # x/out double-buffered + scratch + mask
    live = 4 * nb * H * L * (2 * E + 2 * L) + 4 * nb * H * L * E
    vmem_limit = int(min(64 * 2**20, max(16 * 2**20, 2 * (2 * w_layer + act + live))))

    kernel = functools.partial(
        _encoder_layer_kernel, num_heads=H, seq_len=L, embed_size=E, batch_block=nb)

    return pl.pallas_call(
        kernel,
        out_shape=jax.ShapeDtypeStruct((N, L, E), jnp.float32),
        grid_spec=pltpu.PrefetchScalarGridSpec(
            num_scalar_prefetch=0,
            grid=(num_blocks, num_layers),            # (batch block, layer); layer inner
            in_specs=[
                pl.BlockSpec((nb, L, E), lambda b, l: (b, 0, 0)),      # x (batch block)
                pl.BlockSpec((nb, L, L), lambda b, l: (b, 0, 0)),      # keep mask (int8)
                pl.BlockSpec((H, E), lambda b, l: (0, 0)),             # head masks
                pl.BlockSpec((1, E, E), lambda b, l: (l, 0, 0)),       # fc_out W^T (bf16)
                pl.BlockSpec((1, 1, E), lambda b, l: (l, 0, 0)),       # fc_out bias
                pl.BlockSpec((1, 1, E), lambda b, l: (l, 0, 0)),       # norm1 weight
                pl.BlockSpec((1, 1, E), lambda b, l: (l, 0, 0)),       # norm1 bias
                pl.BlockSpec((1, E, FE), lambda b, l: (l, 0, 0)),      # ffn W1^T (bf16)
                pl.BlockSpec((1, 1, FE), lambda b, l: (l, 0, 0)),      # ffn b1
                pl.BlockSpec((1, FE, E), lambda b, l: (l, 0, 0)),      # ffn W2^T (bf16)
                pl.BlockSpec((1, 1, E), lambda b, l: (l, 0, 0)),       # ffn b2
                pl.BlockSpec((1, 1, E), lambda b, l: (l, 0, 0)),       # norm2 weight
                pl.BlockSpec((1, 1, E), lambda b, l: (l, 0, 0)),       # norm2 bias
            ],
            out_specs=pl.BlockSpec((nb, L, E), lambda b, l: (b, 0, 0)),
            scratch_shapes=[pltpu.VMEM((nb, L, E), jnp.float32)],      # activation carry
        ),
        compiler_params=pltpu.CompilerParams(
            dimension_semantics=("parallel", "arbitrary"),
            vmem_limit_bytes=vmem_limit),
    )(x, keep, hmask, fcw_t, fcb, ln1w, ln1b, w1_t, b1, w2_t, b2, ln2w, ln2b)


def _init_params(key, *, num_layers, embed_size, num_heads, forward_expansion):
    """Deterministic params (PyTorch layout, stacked over layers)."""
    E = embed_size
    FE = forward_expansion * E
    ks = jax.random.split(key, 10)

    def lin(kw, kb, n, out_f, in_f):
        bound = 1.0 / math.sqrt(in_f)           # torch nn.Linear default init bound
        w = jax.random.uniform(kw, (n, out_f, in_f), jnp.float32, -bound, bound)
        b = jax.random.uniform(kb, (n, out_f), jnp.float32, -bound, bound)
        return w, b

    fc_w, fc_b = lin(ks[0], ks[1], num_layers, E, E)       # MaskedSelfAttention.fc_out
    f1_w, f1_b = lin(ks[2], ks[3], num_layers, FE, E)      # feed_forward[0]
    f2_w, f2_b = lin(ks[4], ks[5], num_layers, E, FE)      # feed_forward[2]
    # LayerNorm affine params randomized slightly so the test exercises them
    # (torch default is weight=1, bias=0).
    ln1_w = 1.0 + 0.1 * jax.random.normal(ks[6], (num_layers, E), jnp.float32)
    ln1_b = 0.1 * jax.random.normal(ks[7], (num_layers, E), jnp.float32)
    ln2_w = 1.0 + 0.1 * jax.random.normal(ks[8], (num_layers, E), jnp.float32)
    ln2_b = 0.1 * jax.random.normal(ks[9], (num_layers, E), jnp.float32)
    # NOTE: MaskedSelfAttention's per-head values/keys/queries Linears exist in the
    # reference module but are never used by its forward(), so they are omitted.
    return dict(fc_out_w=fc_w, fc_out_b=fc_b,
                ffn1_w=f1_w, ffn1_b=f1_b, ffn2_w=f2_w, ffn2_b=f2_b,
                ln1_w=ln1_w, ln1_b=ln1_b, ln2_w=ln2_w, ln2_b=ln2_b)


def _reference(x, params, *, num_heads, attn_mask=None, key_padding_mask=None):
    """Pure-JAX f32 replica of TransformerEncoder.forward (eval mode: dropout = identity)."""
    N, L, E = x.shape
    H = num_heads
    D = E // H
    num_layers = params["fc_out_w"].shape[0]

    def layer_norm(y, w, b):
        mu = jnp.mean(y, axis=-1, keepdims=True)
        var = jnp.mean((y - mu) ** 2, axis=-1, keepdims=True)
        return (y - mu) / jnp.sqrt(var + 1e-5) * w + b

    for l in range(num_layers):
        q = x.reshape(N, L, H, D)
        energy = jnp.einsum('nqhd,nkhd->nhqk', q, q)
        if attn_mask is not None:
            energy = jnp.where(attn_mask[None, None, :, :] == 0,
                               jnp.float32(-1e3), energy)
        if key_padding_mask is not None:
            energy = jnp.where(key_padding_mask[:, None, None, :] == 0,
                               jnp.float32(-1e3), energy)
        attn = jax.nn.softmax(energy / math.sqrt(E), axis=3)
        ctx = jnp.einsum('nhql,nlhd->nqhd', attn, q).reshape(N, L, E)
        att_out = ctx @ params["fc_out_w"][l].T + params["fc_out_b"][l]
        h = layer_norm(att_out + x, params["ln1_w"][l], params["ln1_b"][l])
        f = jnp.maximum(h @ params["ffn1_w"][l].T + params["ffn1_b"][l], 0.0)
        f = f @ params["ffn2_w"][l].T + params["ffn2_b"][l]
        x = layer_norm(f + h, params["ln2_w"][l], params["ln2_b"][l])
    return x


if __name__ == "__main__":
    # Small shapes: batch=2, seq=8, embed=32, heads=4 (head_dim=8), 2 layers, expansion=4.
    N, L, E, H = 2, 8, 32, 4
    NUM_LAYERS, EXPANSION = 2, 4

    root = jax.random.PRNGKey(0)
    kp, kx = jax.random.split(root)
    params = _init_params(kp, num_layers=NUM_LAYERS, embed_size=E,
                          num_heads=H, forward_expansion=EXPANSION)
    x = jax.random.normal(kx, (N, L, E), jnp.float32)

    attn_mask = jnp.tril(jnp.ones((L, L), jnp.float32))                  # causal, 1 = keep
    key_padding_mask = jnp.ones((N, L), jnp.float32).at[1, L - 2:].set(0.0)

    out = transformer_encoder(x, params, num_heads=H,
                              attn_mask=attn_mask,
                              key_padding_mask=key_padding_mask)
    out = jax.block_until_ready(out)

    ref = _reference(x, params, num_heads=H, attn_mask=attn_mask,
                     key_padding_mask=key_padding_mask)
    assert out.shape == (N, L, E)
    # Tolerance covers bf16 MXU inputs (weights + activations cast at the dot, f32
    # accumulation) compounded across 2 fused layers, plus the approximate EUP
    # reciprocal in the softmax; post-LN outputs are O(1).
    err = float(jnp.max(jnp.abs(out - ref)))
    assert err < 5e-2, f"mismatch vs reference: max abs err {err}"
    print("KERNEL_OK")
</pallas_src>

<mosaic_0001>
module attributes {stable_mosaic.version = 11 : i64} {
  func.func @_encoder_layer_kernel(%arg0: i32, %arg1: i32, %arg2: memref<2x8x32xf32, #tpu.memory_space<vmem>>, %arg3: memref<2x8x8xi8, #tpu.memory_space<vmem>>, %arg4: memref<4x32xf32, #tpu.memory_space<vmem>>, %arg5: memref<1x32x32xbf16, #tpu.memory_space<vmem>>, %arg6: memref<1x1x32xf32, #tpu.memory_space<vmem>>, %arg7: memref<1x1x32xf32, #tpu.memory_space<vmem>>, %arg8: memref<1x1x32xf32, #tpu.memory_space<vmem>>, %arg9: memref<1x32x128xbf16, #tpu.memory_space<vmem>>, %arg10: memref<1x1x128xf32, #tpu.memory_space<vmem>>, %arg11: memref<1x128x32xbf16, #tpu.memory_space<vmem>>, %arg12: memref<1x1x32xf32, #tpu.memory_space<vmem>>, %arg13: memref<1x1x32xf32, #tpu.memory_space<vmem>>, %arg14: memref<1x1x32xf32, #tpu.memory_space<vmem>>, %arg15: memref<2x8x32xf32, #tpu.memory_space<vmem>>, %arg16: memref<2x8x32xf32, #tpu.memory_space<vmem>>) attributes {dimension_semantics = [#tpu.dimension_semantics<parallel>, #tpu.dimension_semantics<arbitrary>], iteration_bounds = array<i64: 1, 2>, scalar_prefetch = 0 : i64, scratch_operands = 1 : i64, tpu.core_type = #tpu.core_type<tc>, window_params = [{transform_indices = @transform_0, window_bounds = array<i64: 2, 8, 32>}, {transform_indices = @transform_1, window_bounds = array<i64: 2, 8, 8>}, {pipeline_mode = #tpu.pipeline_mode<synchronous>, transform_indices = @transform_2, window_bounds = array<i64: 4, 32>}, {transform_indices = @transform_3, window_bounds = array<i64: 1, 32, 32>}, {transform_indices = @transform_4, window_bounds = array<i64: 1, 1, 32>}, {transform_indices = @transform_5, window_bounds = array<i64: 1, 1, 32>}, {transform_indices = @transform_6, window_bounds = array<i64: 1, 1, 32>}, {transform_indices = @transform_7, window_bounds = array<i64: 1, 32, 128>}, {transform_indices = @transform_8, window_bounds = array<i64: 1, 1, 128>}, {transform_indices = @transform_9, window_bounds = array<i64: 1, 128, 32>}, {transform_indices = @transform_10, window_bounds = array<i64: 1, 1, 32>}, {transform_indices = @transform_11, window_bounds = array<i64: 1, 1, 32>}, {transform_indices = @transform_12, window_bounds = array<i64: 1, 1, 32>}, {transform_indices = @transform_13, window_bounds = array<i64: 2, 8, 32>}]} {
    %c0_i32 = arith.constant 0 : i32
    %0 = arith.cmpi eq, %arg1, %c0_i32 : i32
    %1 = arith.extui %0 : i1 to i32
    %c0_i32_0 = arith.constant 0 : i32
    %2 = arith.cmpi ne, %1, %c0_i32_0 : i32
    scf.if %2 {
      %c0_62 = arith.constant 0 : index
      %c0_63 = arith.constant 0 : index
      %c0_64 = arith.constant 0 : index
      %138 = vector.load %arg2[%c0_62, %c0_63, %c0_64] : memref<2x8x32xf32, #tpu.memory_space<vmem>>, vector<2x8x32xf32>
      %c0_65 = arith.constant 0 : index
      %c0_66 = arith.constant 0 : index
      %c0_67 = arith.constant 0 : index
      %139 = vector.load %arg16[%c0_65, %c0_66, %c0_67] : memref<2x8x32xf32, #tpu.memory_space<vmem>>, vector<2x8x32xf32>
      tpu.vector_store %arg16[%c0_65, %c0_66, %c0_67], %138 {strides = array<i32>} : memref<2x8x32xf32, #tpu.memory_space<vmem>>, vector<2x8x32xf32>,
    } else {
    }
    %c0 = arith.constant 0 : index
    %c0_1 = arith.constant 0 : index
    %c0_2 = arith.constant 0 : index
    %3 = vector.load %arg16[%c0, %c0_1, %c0_2] : memref<2x8x32xf32, #tpu.memory_space<vmem>>, vector<2x8x32xf32>
    %c0_3 = arith.constant 0 : index
    %c0_4 = arith.constant 0 : index
    %c0_5 = arith.constant 0 : index
    %4 = vector.load %arg3[%c0_3, %c0_4, %c0_5] : memref<2x8x8xi8, #tpu.memory_space<vmem>>, vector<2x8x8xi8>
    %5 = arith.sitofp %4 : vector<2x8x8xi8> to vector<2x8x8xf32>
    %6 = vector.shape_cast %5 : vector<2x8x8xf32> to vector<2x1x8x8xf32>
    %7 = vector.shape_cast %6 : vector<2x1x8x8xf32> to vector<2x1x8x8xf32>
    %8 = vector.broadcast %7 : vector<2x1x8x8xf32> to vector<2x4x8x8xf32>
    %9 = vector.shape_cast %8 : vector<2x4x8x8xf32> to vector<8x8x8xf32>
    %c0_6 = arith.constant 0 : index
    %c0_7 = arith.constant 0 : index
    %10 = vector.load %arg4[%c0_6, %c0_7] : memref<4x32xf32, #tpu.memory_space<vmem>>, vector<4x32xf32>
    %11 = vector.shape_cast %3 : vector<2x8x32xf32> to vector<2x1x8x32xf32>
    %12 = vector.shape_cast %11 : vector<2x1x8x32xf32> to vector<2x1x8x32xf32>
    %13 = vector.broadcast %12 : vector<2x1x8x32xf32> to vector<2x4x8x32xf32>
    %14 = vector.shape_cast %10 : vector<4x32xf32> to vector<1x4x1x32xf32>
    %15 = vector.broadcast %14 : vector<1x4x1x32xf32> to vector<2x4x8x32xf32>
    %16 = arith.mulf %13, %15 : vector<2x4x8x32xf32>
    %17 = vector.shape_cast %16 : vector<2x4x8x32xf32> to vector<8x8x32xf32>
    %cst = arith.constant 0.176776692 : f32
    %18 = vector.broadcast %cst : f32 to vector<2x8x32xf32>
    %19 = arith.mulf %3, %18 : vector<2x8x32xf32>
    %20 = vector.shape_cast %19 : vector<2x8x32xf32> to vector<2x1x8x32xf32>
    %21 = vector.shape_cast %20 : vector<2x1x8x32xf32> to vector<2x1x8x32xf32>
    %22 = vector.broadcast %21 : vector<2x1x8x32xf32> to vector<2x4x8x32xf32>
    %23 = vector.shape_cast %22 : vector<2x4x8x32xf32> to vector<8x8x32xf32>
    %24 = arith.truncf %17 : vector<8x8x32xf32> to vector<8x8x32xbf16>
    %25 = arith.truncf %23 : vector<8x8x32xf32> to vector<8x8x32xbf16>
    "tpu.trace_start"() <{level = 10 : i32, message = "bqe,bke->bqk"}> : () -> ()
    %cst_8 = arith.constant dense<0.000000e+00> : vector<8x8x8xf32>
    %26 = tpu.matmul %25, %24, %cst_8 {dimension_numbers = #tpu.dot_dimension_numbers<[2], [2], [1], [1], [0, 0, 0, 1, 1, 1], [0], [0]>} : vector<8x8x32xbf16>, vector<8x8x32xbf16>, vector<8x8x8xf32> -> vector<8x8x8xf32>
    %cst_9 = arith.constant 0.000000e+00 : f32
    "tpu.trace_stop"() : () -> ()
    %27 = vector.broadcast %cst_9 : f32 to vector<8x8x8xf32>
    %28 = arith.cmpf one, %9, %27 : vector<8x8x8xf32>
    %cst_10 = arith.constant -176.776703 : f32
    %29 = vector.broadcast %cst_10 : f32 to vector<8x8x8xf32>
    %30 = arith.select %28, %26, %29 : vector<8x8x8xi1>, vector<8x8x8xf32>
    %cst_11 = arith.constant dense<0xFF800000> : vector<8x8xf32>
    %31 = vector.multi_reduction <maximumf>, %30, %cst_11 [2] : vector<8x8x8xf32> to vector<8x8xf32>
    %32 = vector.shape_cast %31 : vector<8x8xf32> to vector<8x8x1xf32>
    %33 = vector.broadcast %32 : vector<8x8x1xf32> to vector<8x8x8xf32>
    %34 = arith.subf %30, %33 : vector<8x8x8xf32>
    %35 = math.exp %34 : vector<8x8x8xf32>
    %cst_12 = arith.constant dense<0.000000e+00> : vector<8x8xf32>
    %36 = vector.multi_reduction <add>, %35, %cst_12 [2] : vector<8x8x8xf32> to vector<8x8xf32>
    %37 = vector.shape_cast %36 : vector<8x8xf32> to vector<8x8x1xf32>
    %38 = tpu.reciprocal %37 {approx = true} : vector<8x8x1xf32> -> vector<8x8x1xf32>
    %39 = vector.broadcast %38 : vector<8x8x1xf32> to vector<8x8x8xf32>
    %40 = arith.mulf %35, %39 : vector<8x8x8xf32>
    %41 = arith.truncf %40 : vector<8x8x8xf32> to vector<8x8x8xbf16>
    "tpu.trace_start"() <{level = 10 : i32, message = "bqk,bke->bqe"}> : () -> ()
    %cst_13 = arith.constant dense<0.000000e+00> : vector<8x8x32xf32>
    %42 = tpu.matmul %41, %24, %cst_13 {dimension_numbers = #tpu.dot_dimension_numbers<[2], [1], [1], [2], [0, 0, 0, 1, 1, 2], [0], [0]>} : vector<8x8x8xbf16>, vector<8x8x32xbf16>, vector<8x8x32xf32> -> vector<8x8x32xf32>
    "tpu.trace_stop"() : () -> ()
    %43 = vector.shape_cast %42 : vector<8x8x32xf32> to vector<2x4x8x32xf32>
    %44 = vector.extract_strided_slice %43 {offsets = [0, 0, 0, 0], sizes = [2, 1, 8, 32], strides = [1, 1, 1, 1]} : vector<2x4x8x32xf32> to vector<2x1x8x32xf32>
    %45 = vector.shape_cast %44 : vector<2x1x8x32xf32> to vector<2x8x32xf32>
    %46 = vector.extract_strided_slice %43 {offsets = [0, 1, 0, 0], sizes = [2, 1, 8, 32], strides = [1, 1, 1, 1]} : vector<2x4x8x32xf32> to vector<2x1x8x32xf32>
    %47 = vector.shape_cast %46 : vector<2x1x8x32xf32> to vector<2x8x32xf32>
    %48 = arith.addf %45, %47 : vector<2x8x32xf32>
    %49 = vector.extract_strided_slice %43 {offsets = [0, 2, 0, 0], sizes = [2, 1, 8, 32], strides = [1, 1, 1, 1]} : vector<2x4x8x32xf32> to vector<2x1x8x32xf32>
    %50 = vector.shape_cast %49 : vector<2x1x8x32xf32> to vector<2x8x32xf32>
    %51 = arith.addf %48, %50 : vector<2x8x32xf32>
    %52 = vector.extract_strided_slice %43 {offsets = [0, 3, 0, 0], sizes = [2, 1, 8, 32], strides = [1, 1, 1, 1]} : vector<2x4x8x32xf32> to vector<2x1x8x32xf32>
    %53 = vector.shape_cast %52 : vector<2x1x8x32xf32> to vector<2x8x32xf32>
    %54 = arith.addf %51, %53 : vector<2x8x32xf32>
    %55 = vector.shape_cast %54 : vector<2x8x32xf32> to vector<16x32xf32>
    %56 = vector.shape_cast %3 : vector<2x8x32xf32> to vector<16x32xf32>
    %57 = arith.truncf %55 : vector<16x32xf32> to vector<16x32xbf16>
    %c0_14 = arith.constant 0 : index
    %c0_15 = arith.constant 0 : index
    %c0_16 = arith.constant 0 : index
    %58 = vector.load %arg5[%c0_14, %c0_15, %c0_16] : memref<1x32x32xbf16, #tpu.memory_space<vmem>>, vector<1x32x32xbf16>
    %59 = vector.shape_cast %58 : vector<1x32x32xbf16> to vector<32x32xbf16>
    %cst_17 = arith.constant dense<0.000000e+00> : vector<16x32xf32>
    %60 = tpu.matmul %57, %59, %cst_17 {dimension_numbers = #tpu.dot_dimension_numbers<[1], [0], [0], [1], [0, 0, 1, 1], [], []>} : vector<16x32xbf16>, vector<32x32xbf16>, vector<16x32xf32> -> vector<16x32xf32>
    %c0_18 = arith.constant 0 : index
    %c0_19 = arith.constant 0 : index
    %c0_20 = arith.constant 0 : index
    %61 = vector.load %arg6[%c0_18, %c0_19, %c0_20] : memref<1x1x32xf32, #tpu.memory_space<vmem>>, vector<1x1x32xf32>
    %62 = vector.shape_cast %61 : vector<1x1x32xf32> to vector<1x32xf32>
    %63 = vector.broadcast %62 : vector<1x32xf32> to vector<16x32xf32>
    %64 = arith.addf %60, %63 : vector<16x32xf32>
    %65 = arith.addf %64, %56 : vector<16x32xf32>
    %c0_21 = arith.constant 0 : index
    %c0_22 = arith.constant 0 : index
    %c0_23 = arith.constant 0 : index
    %66 = vector.load %arg7[%c0_21, %c0_22, %c0_23] : memref<1x1x32xf32, #tpu.memory_space<vmem>>, vector<1x1x32xf32>
    %67 = vector.shape_cast %66 : vector<1x1x32xf32> to vector<1x32xf32>
    %c0_24 = arith.constant 0 : index
    %c0_25 = arith.constant 0 : index
    %c0_26 = arith.constant 0 : index
    %68 = vector.load %arg8[%c0_24, %c0_25, %c0_26] : memref<1x1x32xf32, #tpu.memory_space<vmem>>, vector<1x1x32xf32>
    %69 = vector.shape_cast %68 : vector<1x1x32xf32> to vector<1x32xf32>
    %cst_27 = arith.constant dense<0.000000e+00> : vector<16xf32>
    %70 = vector.multi_reduction <add>, %65, %cst_27 [1] : vector<16x32xf32> to vector<16xf32>
    %71 = vector.shape_cast %70 : vector<16xf32> to vector<16x1xf32>
    %cst_28 = arith.constant 3.200000e+01 : f32
    %72 = vector.broadcast %cst_28 : f32 to vector<16x1xf32>
    %73 = arith.divf %71, %72 : vector<16x1xf32>
    %74 = vector.broadcast %73 : vector<16x1xf32> to vector<16x32xf32>
    %75 = arith.subf %65, %74 : vector<16x32xf32>
    %76 = arith.mulf %75, %75 : vector<16x32xf32>
    %cst_29 = arith.constant dense<0.000000e+00> : vector<16xf32>
    %77 = vector.multi_reduction <add>, %76, %cst_29 [1] : vector<16x32xf32> to vector<16xf32>
    %78 = vector.shape_cast %77 : vector<16xf32> to vector<16x1xf32>
    %cst_30 = arith.constant 3.200000e+01 : f32
    %79 = vector.broadcast %cst_30 : f32 to vector<16x1xf32>
    %80 = arith.divf %78, %79 : vector<16x1xf32>
    %cst_31 = arith.constant 9.99999974E-6 : f32
    %81 = vector.broadcast %cst_31 : f32 to vector<16x1xf32>
    %82 = arith.addf %80, %81 : vector<16x1xf32>
    %83 = math.rsqrt %82 : vector<16x1xf32>
    %84 = vector.broadcast %83 : vector<16x1xf32> to vector<16x32xf32>
    %85 = arith.mulf %75, %84 : vector<16x32xf32>
    %86 = vector.broadcast %67 : vector<1x32xf32> to vector<16x32xf32>
    %87 = arith.mulf %85, %86 : vector<16x32xf32>
    %88 = vector.broadcast %69 : vector<1x32xf32> to vector<16x32xf32>
    %89 = arith.addf %87, %88 : vector<16x32xf32>
    %90 = arith.truncf %89 : vector<16x32xf32> to vector<16x32xbf16>
    %c0_32 = arith.constant 0 : index
    %c0_33 = arith.constant 0 : index
    %c0_34 = arith.constant 0 : index
    %91 = vector.load %arg9[%c0_32, %c0_33, %c0_34] : memref<1x32x128xbf16, #tpu.memory_space<vmem>>, vector<1x32x128xbf16>
    %92 = vector.shape_cast %91 : vector<1x32x128xbf16> to vector<32x128xbf16>
    %cst_35 = arith.constant dense<0.000000e+00> : vector<16x128xf32>
    %93 = tpu.matmul %90, %92, %cst_35 {dimension_numbers = #tpu.dot_dimension_numbers<[1], [0], [0], [1], [0, 0, 1, 1], [], []>} : vector<16x32xbf16>, vector<32x128xbf16>, vector<16x128xf32> -> vector<16x128xf32>
    %c0_36 = arith.constant 0 : index
    %c0_37 = arith.constant 0 : index
    %c0_38 = arith.constant 0 : index
    %94 = vector.load %arg10[%c0_36, %c0_37, %c0_38] : memref<1x1x128xf32, #tpu.memory_space<vmem>>, vector<1x1x128xf32>
    %95 = vector.shape_cast %94 : vector<1x1x128xf32> to vector<1x128xf32>
    %96 = vector.broadcast %95 : vector<1x128xf32> to vector<16x128xf32>
    %97 = arith.addf %93, %96 : vector<16x128xf32>
    %cst_39 = arith.constant 0.000000e+00 : f32
    %98 = vector.broadcast %cst_39 : f32 to vector<16x128xf32>
    %99 = arith.maximumf %97, %98 : vector<16x128xf32>
    %100 = arith.truncf %99 : vector<16x128xf32> to vector<16x128xbf16>
    %c0_40 = arith.constant 0 : index
    %c0_41 = arith.constant 0 : index
    %c0_42 = arith.constant 0 : index
    %101 = vector.load %arg11[%c0_40, %c0_41, %c0_42] : memref<1x128x32xbf16, #tpu.memory_space<vmem>>, vector<1x128x32xbf16>
    %102 = vector.shape_cast %101 : vector<1x128x32xbf16> to vector<128x32xbf16>
    %cst_43 = arith.constant dense<0.000000e+00> : vector<16x32xf32>
    %103 = tpu.matmul %100, %102, %cst_43 {dimension_numbers = #tpu.dot_dimension_numbers<[1], [0], [0], [1], [0, 0, 1, 1], [], []>} : vector<16x128xbf16>, vector<128x32xbf16>, vector<16x32xf32> -> vector<16x32xf32>
    %c0_44 = arith.constant 0 : index
    %c0_45 = arith.constant 0 : index
    %c0_46 = arith.constant 0 : index
    %104 = vector.load %arg12[%c0_44, %c0_45, %c0_46] : memref<1x1x32xf32, #tpu.memory_space<vmem>>, vector<1x1x32xf32>
    %105 = vector.shape_cast %104 : vector<1x1x32xf32> to vector<1x32xf32>
    %106 = vector.broadcast %105 : vector<1x32xf32> to vector<16x32xf32>
    %107 = arith.addf %103, %106 : vector<16x32xf32>
    %108 = arith.addf %107, %89 : vector<16x32xf32>
    %c0_47 = arith.constant 0 : index
    %c0_48 = arith.constant 0 : index
    %c0_49 = arith.constant 0 : index
    %109 = vector.load %arg13[%c0_47, %c0_48, %c0_49] : memref<1x1x32xf32, #tpu.memory_space<vmem>>, vector<1x1x32xf32>
    %110 = vector.shape_cast %109 : vector<1x1x32xf32> to vector<1x32xf32>
    %c0_50 = arith.constant 0 : index
    %c0_51 = arith.constant 0 : index
    %c0_52 = arith.constant 0 : index
    %111 = vector.load %arg14[%c0_50, %c0_51, %c0_52] : memref<1x1x32xf32, #tpu.memory_space<vmem>>, vector<1x1x32xf32>
    %112 = vector.shape_cast %111 : vector<1x1x32xf32> to vector<1x32xf32>
    %cst_53 = arith.constant dense<0.000000e+00> : vector<16xf32>
    %113 = vector.multi_reduction <add>, %108, %cst_53 [1] : vector<16x32xf32> to vector<16xf32>
    %114 = vector.shape_cast %113 : vector<16xf32> to vector<16x1xf32>
    %cst_54 = arith.constant 3.200000e+01 : f32
    %115 = vector.broadcast %cst_54 : f32 to vector<16x1xf32>
    %116 = arith.divf %114, %115 : vector<16x1xf32>
    %117 = vector.broadcast %116 : vector<16x1xf32> to vector<16x32xf32>
    %118 = arith.subf %108, %117 : vector<16x32xf32>
    %119 = arith.mulf %118, %118 : vector<16x32xf32>
    %cst_55 = arith.constant dense<0.000000e+00> : vector<16xf32>
    %120 = vector.multi_reduction <add>, %119, %cst_55 [1] : vector<16x32xf32> to vector<16xf32>
    %121 = vector.shape_cast %120 : vector<16xf32> to vector<16x1xf32>
    %cst_56 = arith.constant 3.200000e+01 : f32
    %122 = vector.broadcast %cst_56 : f32 to vector<16x1xf32>
    %123 = arith.divf %121, %122 : vector<16x1xf32>
    %cst_57 = arith.constant 9.99999974E-6 : f32
    %124 = vector.broadcast %cst_57 : f32 to vector<16x1xf32>
    %125 = arith.addf %123, %124 : vector<16x1xf32>
    %126 = math.rsqrt %125 : vector<16x1xf32>
    %127 = vector.broadcast %126 : vector<16x1xf32> to vector<16x32xf32>
    %128 = arith.mulf %118, %127 : vector<16x32xf32>
    %129 = vector.broadcast %110 : vector<1x32xf32> to vector<16x32xf32>
    %130 = arith.mulf %128, %129 : vector<16x32xf32>
    %131 = vector.broadcast %112 : vector<1x32xf32> to vector<16x32xf32>
    %132 = arith.addf %130, %131 : vector<16x32xf32>
    %133 = vector.shape_cast %132 : vector<16x32xf32> to vector<2x8x32xf32>
    %c0_58 = arith.constant 0 : index
    %c0_59 = arith.constant 0 : index
    %c0_60 = arith.constant 0 : index
    %134 = vector.load %arg16[%c0_58, %c0_59, %c0_60] : memref<2x8x32xf32, #tpu.memory_space<vmem>>, vector<2x8x32xf32>
    tpu.vector_store %arg16[%c0_58, %c0_59, %c0_60], %133 {strides = array<i32>} : memref<2x8x32xf32, #tpu.memory_space<vmem>>, vector<2x8x32xf32>,
    %c1_i32 = arith.constant 1 : i32
    %135 = arith.cmpi eq, %arg1, %c1_i32 : i32
    %136 = arith.extui %135 : i1 to i32
    %c0_i32_61 = arith.constant 0 : i32
    %137 = arith.cmpi ne, %136, %c0_i32_61 : i32
    scf.if %137 {
      %c0_62 = arith.constant 0 : index
      %c0_63 = arith.constant 0 : index
      %c0_64 = arith.constant 0 : index
      %138 = vector.load %arg15[%c0_62, %c0_63, %c0_64] : memref<2x8x32xf32, #tpu.memory_space<vmem>>, vector<2x8x32xf32>
      tpu.vector_store %arg15[%c0_62, %c0_63, %c0_64], %133 {strides = array<i32>} : memref<2x8x32xf32, #tpu.memory_space<vmem>>, vector<2x8x32xf32>,
    } else {
    }
    return
  }
  func.func @transform_0(%arg0: i32, %arg1: i32) -> (i32, i32, i32) {
    %c0_i32 = arith.constant 0 : i32
    %c0_i32_0 = arith.constant 0 : i32
    %c0_i32_1 = arith.constant 0 : i32
    return %arg0, %c0_i32, %c0_i32_0 : i32, i32, i32
  }
  func.func @transform_1(%arg0: i32, %arg1: i32) -> (i32, i32, i32) {
    %c0_i32 = arith.constant 0 : i32
    %c0_i32_0 = arith.constant 0 : i32
    %c0_i32_1 = arith.constant 0 : i32
    return %arg0, %c0_i32, %c0_i32_0 : i32, i32, i32
  }
  func.func @transform_2(%arg0: i32, %arg1: i32) -> (i32, i32) {
    %c0_i32 = arith.constant 0 : i32
    %c0_i32_0 = arith.constant 0 : i32
    %c0_i32_1 = arith.constant 0 : i32
    return %c0_i32, %c0_i32_0 : i32, i32
  }
  func.func @transform_3(%arg0: i32, %arg1: i32) -> (i32, i32, i32) {
    %c0_i32 = arith.constant 0 : i32
    %c0_i32_0 = arith.constant 0 : i32
    %c0_i32_1 = arith.constant 0 : i32
    return %arg1, %c0_i32, %c0_i32_0 : i32, i32, i32
  }
  func.func @transform_4(%arg0: i32, %arg1: i32) -> (i32, i32, i32) {
    %c0_i32 = arith.constant 0 : i32
    %c0_i32_0 = arith.constant 0 : i32
    %c0_i32_1 = arith.constant 0 : i32
    return %arg1, %c0_i32, %c0_i32_0 : i32, i32, i32
  }
  func.func @transform_5(%arg0: i32, %arg1: i32) -> (i32, i32, i32) {
    %c0_i32 = arith.constant 0 : i32
    %c0_i32_0 = arith.constant 0 : i32
    %c0_i32_1 = arith.constant 0 : i32
    return %arg1, %c0_i32, %c0_i32_0 : i32, i32, i32
  }
  func.func @transform_6(%arg0: i32, %arg1: i32) -> (i32, i32, i32) {
    %c0_i32 = arith.constant 0 : i32
    %c0_i32_0 = arith.constant 0 : i32
    %c0_i32_1 = arith.constant 0 : i32
    return %arg1, %c0_i32, %c0_i32_0 : i32, i32, i32
  }
  func.func @transform_7(%arg0: i32, %arg1: i32) -> (i32, i32, i32) {
    %c0_i32 = arith.constant 0 : i32
    %c0_i32_0 = arith.constant 0 : i32
    %c0_i32_1 = arith.constant 0 : i32
    return %arg1, %c0_i32, %c0_i32_0 : i32, i32, i32
  }
  func.func @transform_8(%arg0: i32, %arg1: i32) -> (i32, i32, i32) {
    %c0_i32 = arith.constant 0 : i32
    %c0_i32_0 = arith.constant 0 : i32
    %c0_i32_1 = arith.constant 0 : i32
    return %arg1, %c0_i32, %c0_i32_0 : i32, i32, i32
  }
  func.func @transform_9(%arg0: i32, %arg1: i32) -> (i32, i32, i32) {
    %c0_i32 = arith.constant 0 : i32
    %c0_i32_0 = arith.constant 0 : i32
    %c0_i32_1 = arith.constant 0 : i32
    return %arg1, %c0_i32, %c0_i32_0 : i32, i32, i32
  }
  func.func @transform_10(%arg0: i32, %arg1: i32) -> (i32, i32, i32) {
    %c0_i32 = arith.constant 0 : i32
    %c0_i32_0 = arith.constant 0 : i32
    %c0_i32_1 = arith.constant 0 : i32
    return %arg1, %c0_i32, %c0_i32_0 : i32, i32, i32
  }
  func.func @transform_11(%arg0: i32, %arg1: i32) -> (i32, i32, i32) {
    %c0_i32 = arith.constant 0 : i32
    %c0_i32_0 = arith.constant 0 : i32
    %c0_i32_1 = arith.constant 0 : i32
    return %arg1, %c0_i32, %c0_i32_0 : i32, i32, i32
  }
  func.func @transform_12(%arg0: i32, %arg1: i32) -> (i32, i32, i32) {
    %c0_i32 = arith.constant 0 : i32
    %c0_i32_0 = arith.constant 0 : i32
    %c0_i32_1 = arith.constant 0 : i32
    return %arg1, %c0_i32, %c0_i32_0 : i32, i32, i32
  }
  func.func @transform_13(%arg0: i32, %arg1: i32) -> (i32, i32, i32) {
    %c0_i32 = arith.constant 0 : i32
    %c0_i32_0 = arith.constant 0 : i32
    %c0_i32_1 = arith.constant 0 : i32
    return %arg0, %c0_i32, %c0_i32_0 : i32, i32, i32
  }
}

</mosaic_0001>

<llo_original>
// kernel: tpu_custom_call.1
$region0: #{tpu_custom_call.1}
  #allocation0 [shape = 'u32[]', space=smem, size = 0x4, offset = 0x4, fixed_abs, tag = 'smem constant byte address 0x4 - core index']
  #allocation1 [shape = 'u32[144,128]{1,0:T(1,128)}', space=vmem, size = 0x12000, scoped, tag = 'internal scratch']
  #allocation2 [shape = 'f32[2,8,32]{2,1,0:T(8,128)}', space=vmem, size = 0x2000, scoped, tag = 'scratch operand']
  %s0 = inlined_call_operand.vmem [shape: f32[2,8,32], index: 0, kind: input, shape index: {}]
  %s1 = inlined_call_operand.vmem [shape: s8[2,8,8], index: 1, kind: input, shape index: {}]
  %s2 = inlined_call_operand.vmem [shape: f32[4,32], index: 2, kind: input, shape index: {}]
  %s3 = inlined_call_operand.vmem [shape: bf16[2,32,32], index: 3, kind: input, shape index: {}]
  %s4 = inlined_call_operand.vmem [shape: f32[2,1,32], index: 4, kind: input, shape index: {}]
  %s5 = inlined_call_operand.vmem [shape: f32[2,1,32], index: 5, kind: input, shape index: {}]
  %s6 = inlined_call_operand.vmem [shape: f32[2,1,32], index: 6, kind: input, shape index: {}]
  %s7 = inlined_call_operand.vmem [shape: bf16[2,32,128], index: 7, kind: input, shape index: {}]
  %s8 = inlined_call_operand.vmem [shape: f32[2,1,128], index: 8, kind: input, shape index: {}]
  %s9 = inlined_call_operand.vmem [shape: bf16[2,128,32], index: 9, kind: input, shape index: {}]
  %s10 = inlined_call_operand.vmem [shape: f32[2,1,32], index: 10, kind: input, shape index: {}]
  %s11 = inlined_call_operand.vmem [shape: f32[2,1,32], index: 11, kind: input, shape index: {}]
  %s12 = inlined_call_operand.vmem [shape: f32[2,1,32], index: 12, kind: input, shape index: {}]
  %s13 = inlined_call_operand.hbm [shape: f32[2,8,32], index: 13, kind: output, shape index: {}]
  %s14 = sld [smem:[#allocation0]]
  $region93: #{tpu_custom_call.1} parent=0
    _
  %s16 = ssub.s32 1, %s14
  %s17 = scalar_select 0, %s16, %s14
  $region1: #{tpu_custom_call.1} parent=0
    #allocation3 [shape = 'u8[8192]{0}', space=vmem, size = 0x2000, scoped, tag = 'output window, operand 0, single buffered']
    #allocation4 [shape = 's32[2]{0}', space=sflag, size = 0x8, scoped, tag = 'scoped memory for tpu_custom_call.1']
    %18 = vsyncpa [#allocation4], 0
    loop: start=0, step=1, limit=4
    $region2: #{tpu_custom_call.1} parent=1 // loop_pre_header
      _
    $region3: #{tpu_custom_call.1} parent=1 // loop_header
      %s20 = sphi 0, %s24
      %p21 = scmp.ge.s32.totalorder %s20, 4
      %s27 = sphi 0, %s39
      %s28 = sphi 0, %s35
      %s29 = sphi 0, %s27
      %s30 = sphi 0, %s28
      %s31 = sphi 0, %s29
      %s32 = sphi 0, %s30
      %s42 = sphi 0, %s44
      %s45 = sphi 0, %s42
      %s46 = sphi 0, %s45
      %s62 = sphi 0, %s46
      %s68 = sphi 0, %s70
      %s71 = sphi 0, %s68
      %s72 = sphi 0, %s71
      %s88 = sphi 0, %s72
      %s92 = sphi 0, %s92
      %s94 = sphi 0, %s92
      %s95 = sphi 0, %s94
      %s109 = sphi 0, %s95
      %s115 = sphi 0, %s117
      %s118 = sphi 0, %s115
      %s119 = sphi 0, %s118
      %s135 = sphi 0, %s119
      %s141 = sphi 0, %s143
      %s144 = sphi 0, %s141
      %s145 = sphi 0, %s144
      %s161 = sphi 0, %s145
      %s167 = sphi 0, %s169
      %s170 = sphi 0, %s167
      %s171 = sphi 0, %s170
      %s187 = sphi 0, %s171
      %s193 = sphi 0, %s195
      %s196 = sphi 0, %s193
      %s197 = sphi 0, %s196
      %s213 = sphi 0, %s197
      %s219 = sphi 0, %s221
      %s222 = sphi 0, %s219
      %s223 = sphi 0, %s222
      %s239 = sphi 0, %s223
      %s245 = sphi 0, %s247
      %s248 = sphi 0, %s245
      %s249 = sphi 0, %s248
      %s265 = sphi 0, %s249
      %s271 = sphi 0, %s273
      %s274 = sphi 0, %s271
      %s275 = sphi 0, %s274
      %s291 = sphi 0, %s275
      %s297 = sphi 0, %s299
      %s300 = sphi 0, %s297
      %s301 = sphi 0, %s300
      %s317 = sphi 0, %s301
      %s323 = sphi 0, %s325
      %s326 = sphi 0, %s323
      %s327 = sphi 0, %s326
      %s343 = sphi 0, %s327
      %s349 = sphi 0, %s351
      %s352 = sphi 0, %s349
      %s353 = sphi 0, %s352
      %s369 = sphi 0, %s353
      %s375 = sphi 0, %s377
      %s378 = sphi 0, %s375
      %s379 = sphi 0, %s378
      %s395 = sphi 0, %s379
    $region4: #{tpu_custom_call.1} parent=1 // loop_header_branch
      %23 = sbr.rel (%p21) target = $region8
    $region5: #{tpu_custom_call.1} parent=1 // loop_body
      %s25 = ssub.s32 %s20, 1
      %s26 = ssub.s32 %s20, 2
      %s33 = sadd.s32 1, %s28
      %p34 = scmp.ge.s32.totalorder %s33, 2
      %s35 = scalar_select %p34, 0, %s33
      %s36 = sadd.s32 1, %s27
      %s37 = scalar_select %p34, %s36, %s27
      %p38 = scmp.ge.s32.totalorder %s37, 1
      %s39 = scalar_select %p38, 0, %s37
      %s40 = ssub.s32 %s27, %s39
      %p41 = scmp.eq.s32.totalorder %s40, 0
      %s43 = sadd.s32 %s42, 1
      %s44 = scalar_select %p41, %s42, %s43
      %p47 = pneg %p41
      %p48 = scmp.eq.s32.totalorder %s20, 1
      %p49 = por %p47, %p48
      %p50 = scmp.ne.s32.totalorder %s42, %s45
      %p51 = scmp.eq.s32.totalorder %s20, 0
      %p52 = por %p50, %p51
      %p53 = scmp.ne.s32.totalorder %s42, %s45
      %p54 = scmp.eq.s32.totalorder %s25, 1
      %p55 = por %p53, %p54
      %p56 = scmp.ne.s32.totalorder %s45, %s46
      %p57 = scmp.eq.s32.totalorder %s25, 0
      %p58 = por %p56, %p57
      %p59 = scmp.ne.s32.totalorder %s45, %s46
      %p60 = scmp.eq.s32.totalorder %s26, 1
      %p61 = por %p59, %p60
      %p63 = scmp.ne.s32.totalorder %s46, %s62
      %p64 = scmp.eq.s32.totalorder %s26, 0
      %p65 = por %p63, %p64
      %s66 = ssub.s32 %s27, %s39
      %p67 = scmp.eq.s32.totalorder %s66, 0
      %s69 = sadd.s32 %s68, 1
      %s70 = scalar_select %p67, %s68, %s69
      %p73 = pneg %p67
      %p74 = scmp.eq.s32.totalorder %s20, 1
      %p75 = por %p73, %p74
      %p76 = scmp.ne.s32.totalorder %s68, %s71
      %p77 = scmp.eq.s32.totalorder %s20, 0
      %p78 = por %p76, %p77
      %p79 = scmp.ne.s32.totalorder %s68, %s71
      %p80 = scmp.eq.s32.totalorder %s25, 1
      %p81 = por %p79, %p80
      %p82 = scmp.ne.s32.totalorder %s71, %s72
      %p83 = scmp.eq.s32.totalorder %s25, 0
      %p84 = por %p82, %p83
      %p85 = scmp.ne.s32.totalorder %s71, %s72
      %p86 = scmp.eq.s32.totalorder %s26, 1
      %p87 = por %p85, %p86
      %p89 = scmp.ne.s32.totalorder %s72, %s88
      %p90 = scmp.eq.s32.totalorder %s26, 0
      %p91 = por %p89, %p90
      %s93 = sadd.s32 %s92, 1
      %p96 = scmp.eq.s32.totalorder %s20, 1
      %p97 = scmp.ne.s32.totalorder %s92, %s94
      %p98 = scmp.eq.s32.totalorder %s20, 0
      %p99 = por %p97, %p98
      %p100 = scmp.ne.s32.totalorder %s92, %s94
      %p101 = scmp.eq.s32.totalorder %s25, 1
      %p102 = por %p100, %p101
      %p103 = scmp.ne.s32.totalorder %s94, %s95
      %p104 = scmp.eq.s32.totalorder %s25, 0
      %p105 = por %p103, %p104
      %p106 = scmp.ne.s32.totalorder %s94, %s95
      %p107 = scmp.eq.s32.totalorder %s26, 1
      %p108 = por %p106, %p107
      %p110 = scmp.ne.s32.totalorder %s95, %s109
      %p111 = scmp.eq.s32.totalorder %s26, 0
      %p112 = por %p110, %p111
      %s113 = ssub.s32 %s28, %s35
      %p114 = scmp.eq.s32.totalorder %s113, 0
      %s116 = sadd.s32 %s115, 1
      %s117 = scalar_select %p114, %s115, %s116
      %p120 = pneg %p114
      %p121 = scmp.eq.s32.totalorder %s20, 1
      %p122 = por %p120, %p121
      %p123 = scmp.ne.s32.totalorder %s115, %s118
      %p124 = scmp.eq.s32.totalorder %s20, 0
      %p125 = por %p123, %p124
      %p126 = scmp.ne.s32.totalorder %s115, %s118
      %p127 = scmp.eq.s32.totalorder %s25, 1
      %p128 = por %p126, %p127
      %p129 = scmp.ne.s32.totalorder %s118, %s119
      %p130 = scmp.eq.s32.totalorder %s25, 0
      %p131 = por %p129, %p130
      %p132 = scmp.ne.s32.totalorder %s118, %s119
      %p133 = scmp.eq.s32.totalorder %s26, 1
      %p134 = por %p132, %p133
      %p136 = scmp.ne.s32.totalorder %s119, %s135
      %p137 = scmp.eq.s32.totalorder %s26, 0
      %p138 = por %p136, %p137
      %s139 = ssub.s32 %s28, %s35
      %p140 = scmp.eq.s32.totalorder %s139, 0
      %s142 = sadd.s32 %s141, 1
      %s143 = scalar_select %p140, %s141, %s142
      %p146 = pneg %p140
      %p147 = scmp.eq.s32.totalorder %s20, 1
      %p148 = por %p146, %p147
      %p149 = scmp.ne.s32.totalorder %s141, %s144
      %p150 = scmp.eq.s32.totalorder %s20, 0
      %p151 = por %p149, %p150
      %p152 = scmp.ne.s32.totalorder %s141, %s144
      %p153 = scmp.eq.s32.totalorder %s25, 1
      %p154 = por %p152, %p153
      %p155 = scmp.ne.s32.totalorder %s144, %s145
      %p156 = scmp.eq.s32.totalorder %s25, 0
      %p157 = por %p155, %p156
      %p158 = scmp.ne.s32.totalorder %s144, %s145
      %p159 = scmp.eq.s32.totalorder %s26, 1
      %p160 = por %p158, %p159
      %p162 = scmp.ne.s32.totalorder %s145, %s161
      %p163 = scmp.eq.s32.totalorder %s26, 0
      %p164 = por %p162, %p163
      %s165 = ssub.s32 %s28, %s35
      %p166 = scmp.eq.s32.totalorder %s165, 0
      %s168 = sadd.s32 %s167, 1
      %s169 = scalar_select %p166, %s167, %s168
      %p172 = pneg %p166
      %p173 = scmp.eq.s32.totalorder %s20, 1
      %p174 = por %p172, %p173
      %p175 = scmp.ne.s32.totalorder %s167, %s170
      %p176 = scmp.eq.s32.totalorder %s20, 0
      %p177 = por %p175, %p176
      %p178 = scmp.ne.s32.totalorder %s167, %s170
      %p179 = scmp.eq.s32.totalorder %s25, 1
      %p180 = por %p178, %p179
      %p181 = scmp.ne.s32.totalorder %s170, %s171
      %p182 = scmp.eq.s32.totalorder %s25, 0
      %p183 = por %p181, %p182
      %p184 = scmp.ne.s32.totalorder %s170, %s171
      %p185 = scmp.eq.s32.totalorder %s26, 1
      %p186 = por %p184, %p185
      %p188 = scmp.ne.s32.totalorder %s171, %s187
      %p189 = scmp.eq.s32.totalorder %s26, 0
      %p190 = por %p188, %p189
      %s191 = ssub.s32 %s28, %s35
      %p192 = scmp.eq.s32.totalorder %s191, 0
      %s194 = sadd.s32 %s193, 1
      %s195 = scalar_select %p192, %s193, %s194
      %p198 = pneg %p192
      %p199 = scmp.eq.s32.totalorder %s20, 1
      %p200 = por %p198, %p199
      %p201 = scmp.ne.s32.totalorder %s193, %s196
      %p202 = scmp.eq.s32.totalorder %s20, 0
      %p203 = por %p201, %p202
      %p204 = scmp.ne.s32.totalorder %s193, %s196
      %p205 = scmp.eq.s32.totalorder %s25, 1
      %p206 = por %p204, %p205
      %p207 = scmp.ne.s32.totalorder %s196, %s197
      %p208 = scmp.eq.s32.totalorder %s25, 0
      %p209 = por %p207, %p208
      %p210 = scmp.ne.s32.totalorder %s196, %s197
      %p211 = scmp.eq.s32.totalorder %s26, 1
      %p212 = por %p210, %p211
      %p214 = scmp.ne.s32.totalorder %s197, %s213
      %p215 = scmp.eq.s32.totalorder %s26, 0
      %p216 = por %p214, %p215
      %s217 = ssub.s32 %s28, %s35
      %p218 = scmp.eq.s32.totalorder %s217, 0
      %s220 = sadd.s32 %s219, 1
      %s221 = scalar_select %p218, %s219, %s220
      %p224 = pneg %p218
      %p225 = scmp.eq.s32.totalorder %s20, 1
      %p226 = por %p224, %p225
      %p227 = scmp.ne.s32.totalorder %s219, %s222
      %p228 = scmp.eq.s32.totalorder %s20, 0
      %p229 = por %p227, %p228
      %p230 = scmp.ne.s32.totalorder %s219, %s222
      %p231 = scmp.eq.s32.totalorder %s25, 1
      %p232 = por %p230, %p231
      %p233 = scmp.ne.s32.totalorder %s222, %s223
      %p234 = scmp.eq.s32.totalorder %s25, 0
      %p235 = por %p233, %p234
      %p236 = scmp.ne.s32.totalorder %s222, %s223
      %p237 = scmp.eq.s32.totalorder %s26, 1
      %p238 = por %p236, %p237
      %p240 = scmp.ne.s32.totalorder %s223, %s239
      %p241 = scmp.eq.s32.totalorder %s26, 0
      %p242 = por %p240, %p241
      %s243 = ssub.s32 %s28, %s35
      %p244 = scmp.eq.s32.totalorder %s243, 0
      %s246 = sadd.s32 %s245, 1
      %s247 = scalar_select %p244, %s245, %s246
      %p250 = pneg %p244
      %p251 = scmp.eq.s32.totalorder %s20, 1
      %p252 = por %p250, %p251
      %p253 = scmp.ne.s32.totalorder %s245, %s248
      %p254 = scmp.eq.s32.totalorder %s20, 0
      %p255 = por %p253, %p254
      %p256 = scmp.ne.s32.totalorder %s245, %s248
      %p257 = scmp.eq.s32.totalorder %s25, 1
      %p258 = por %p256, %p257
      %p259 = scmp.ne.s32.totalorder %s248, %s249
      %p260 = scmp.eq.s32.totalorder %s25, 0
      %p261 = por %p259, %p260
      %p262 = scmp.ne.s32.totalorder %s248, %s249
      %p263 = scmp.eq.s32.totalorder %s26, 1
      %p264 = por %p262, %p263
      %p266 = scmp.ne.s32.totalorder %s249, %s265
      %p267 = scmp.eq.s32.totalorder %s26, 0
      %p268 = por %p266, %p267
      %s269 = ssub.s32 %s28, %s35
      %p270 = scmp.eq.s32.totalorder %s269, 0
      %s272 = sadd.s32 %s271, 1
      %s273 = scalar_select %p270, %s271, %s272
      %p276 = pneg %p270
      %p277 = scmp.eq.s32.totalorder %s20, 1
      %p278 = por %p276, %p277
      %p279 = scmp.ne.s32.totalorder %s271, %s274
      %p280 = scmp.eq.s32.totalorder %s20, 0
      %p281 = por %p279, %p280
      %p282 = scmp.ne.s32.totalorder %s271, %s274
      %p283 = scmp.eq.s32.totalorder %s25, 1
      %p284 = por %p282, %p283
      %p285 = scmp.ne.s32.totalorder %s274, %s275
      %p286 = scmp.eq.s32.totalorder %s25, 0
      %p287 = por %p285, %p286
      %p288 = scmp.ne.s32.totalorder %s274, %s275
      %p289 = scmp.eq.s32.totalorder %s26, 1
      %p290 = por %p288, %p289
      %p292 = scmp.ne.s32.totalorder %s275, %s291
      %p293 = scmp.eq.s32.totalorder %s26, 0
      %p294 = por %p292, %p293
      %s295 = ssub.s32 %s28, %s35
      %p296 = scmp.eq.s32.totalorder %s295, 0
      %s298 = sadd.s32 %s297, 1
      %s299 = scalar_select %p296, %s297, %s298
      %p302 = pneg %p296
      %p303 = scmp.eq.s32.totalorder %s20, 1
      %p304 = por %p302, %p303
      %p305 = scmp.ne.s32.totalorder %s297, %s300
      %p306 = scmp.eq.s32.totalorder %s20, 0
      %p307 = por %p305, %p306
      %p308 = scmp.ne.s32.totalorder %s297, %s300
      %p309 = scmp.eq.s32.totalorder %s25, 1
      %p310 = por %p308, %p309
      %p311 = scmp.ne.s32.totalorder %s300, %s301
      %p312 = scmp.eq.s32.totalorder %s25, 0
      %p313 = por %p311, %p312
      %p314 = scmp.ne.s32.totalorder %s300, %s301
      %p315 = scmp.eq.s32.totalorder %s26, 1
      %p316 = por %p314, %p315
      %p318 = scmp.ne.s32.totalorder %s301, %s317
      %p319 = scmp.eq.s32.totalorder %s26, 0
      %p320 = por %p318, %p319
      %s321 = ssub.s32 %s28, %s35
      %p322 = scmp.eq.s32.totalorder %s321, 0
      %s324 = sadd.s32 %s323, 1
      %s325 = scalar_select %p322, %s323, %s324
      %p328 = pneg %p322
      %p329 = scmp.eq.s32.totalorder %s20, 1
      %p330 = por %p328, %p329
      %p331 = scmp.ne.s32.totalorder %s323, %s326
      %p332 = scmp.eq.s32.totalorder %s20, 0
      %p333 = por %p331, %p332
      %p334 = scmp.ne.s32.totalorder %s323, %s326
      %p335 = scmp.eq.s32.totalorder %s25, 1
      %p336 = por %p334, %p335
      %p337 = scmp.ne.s32.totalorder %s326, %s327
      %p338 = scmp.eq.s32.totalorder %s25, 0
      %p339 = por %p337, %p338
      %p340 = scmp.ne.s32.totalorder %s326, %s327
      %p341 = scmp.eq.s32.totalorder %s26, 1
      %p342 = por %p340, %p341
      %p344 = scmp.ne.s32.totalorder %s327, %s343
      %p345 = scmp.eq.s32.totalorder %s26, 0
      %p346 = por %p344, %p345
      %s347 = ssub.s32 %s28, %s35
      %p348 = scmp.eq.s32.totalorder %s347, 0
      %s350 = sadd.s32 %s349, 1
      %s351 = scalar_select %p348, %s349, %s350
      %p354 = pneg %p348
      %p355 = scmp.eq.s32.totalorder %s20, 1
      %p356 = por %p354, %p355
      %p357 = scmp.ne.s32.totalorder %s349, %s352
      %p358 = scmp.eq.s32.totalorder %s20, 0
      %p359 = por %p357, %p358
      %p360 = scmp.ne.s32.totalorder %s349, %s352
      %p361 = scmp.eq.s32.totalorder %s25, 1
      %p362 = por %p360, %p361
      %p363 = scmp.ne.s32.totalorder %s352, %s353
      %p364 = scmp.eq.s32.totalorder %s25, 0
      %p365 = por %p363, %p364
      %p366 = scmp.ne.s32.totalorder %s352, %s353
      %p367 = scmp.eq.s32.totalorder %s26, 1
      %p368 = por %p366, %p367
      %p370 = scmp.ne.s32.totalorder %s353, %s369
      %p371 = scmp.eq.s32.totalorder %s26, 0
      %p372 = por %p370, %p371
      %s373 = ssub.s32 %s27, %s39
      %p374 = scmp.eq.s32.totalorder %s373, 0
      %s376 = sadd.s32 %s375, 1
      %s377 = scalar_select %p374, %s375, %s376
      %p380 = pneg %p374
      %p381 = scmp.eq.s32.totalorder %s20, 1
      %p382 = por %p380, %p381
      %p383 = scmp.ne.s32.totalorder %s375, %s378
      %p384 = scmp.eq.s32.totalorder %s20, 0
      %p385 = por %p383, %p384
      %p386 = scmp.ne.s32.totalorder %s375, %s378
      %p387 = scmp.eq.s32.totalorder %s25, 1
      %p388 = por %p386, %p387
      %p389 = scmp.ne.s32.totalorder %s378, %s379
      %p390 = scmp.eq.s32.totalorder %s25, 0
      %p391 = por %p389, %p390
      %p392 = scmp.ne.s32.totalorder %s378, %s379
      %p393 = scmp.eq.s32.totalorder %s26, 1
      %p394 = por %p392, %p393
      %p396 = scmp.ne.s32.totalorder %s379, %s395
      %p397 = scmp.eq.s32.totalorder %s26, 0
      %p398 = por %p396, %p397
      %p399 = scmp.le.s32.totalorder 1, %s20
      %p400 = scmp.lt.s32.totalorder %s20, 3
      %p401 = pnand %p399, %p400
      %p402 = pneg %p401
      // Predicated region
      $region9: #{tpu_custom_call.1} parent=5 // pred_check
        _
      $region10: #{tpu_custom_call.1} parent=5 // pred_check_branch
        %404 = sbr.rel (%p401) target = $region12
      $region11: #{tpu_custom_call.1} parent=5 // pred_region
        %s405 = ssub.s32 %s20, 1
        // Predicated region
        $region13: #{tpu_custom_call.1} parent=11 // pred_check
          %p406 = pneg %p58
        $region14: #{tpu_custom_call.1} parent=11 // pred_check_branch
          %408 = sbr.rel (%p406) target = $region16
        $region15: #{tpu_custom_call.1} parent=11 // pred_region
          %s409 = smul.u32 2, %s29
          %p410 = scmp.lt.s32.totalorder %s409, 1
          %s411 = scalar_select %p410, %s409, 1
          %s412 = smul.addr %s411, 8
          %s413 = scalar_lea.vmem %s0, %s412
          %s414 = smul.u32 2, %s29
        $region16: #{tpu_custom_call.1} parent=11 // pred_fallthru
          _
        // Predicated region
        $region17: #{tpu_custom_call.1} parent=11 // pred_check
          %p415 = pneg %p84
        $region18: #{tpu_custom_call.1} parent=11 // pred_check_branch
          %417 = sbr.rel (%p415) target = $region20
        $region19: #{tpu_custom_call.1} parent=11 // pred_region
          %s418 = smul.u32 2, %s29
          %p419 = scmp.lt.s32.totalorder %s418, 1
          %s420 = scalar_select %p419, %s418, 1
          %s421 = smul.addr %s420, 2
          %s422 = scalar_lea.vmem %s1, %s421
          %s423 = smul.u32 2, %s29
        $region20: #{tpu_custom_call.1} parent=11 // pred_fallthru
          _
        // Predicated region
        $region21: #{tpu_custom_call.1} parent=11 // pred_check
          %p424 = pneg %p105
        $region22: #{tpu_custom_call.1} parent=11 // pred_check_branch
          %426 = sbr.rel (%p424) target = $region24
        $region23: #{tpu_custom_call.1} parent=11 // pred_region
          _
        $region24: #{tpu_custom_call.1} parent=11 // pred_fallthru
          _
      $region12: #{tpu_custom_call.1} parent=5 // pred_fallthru
        _
      %p427 = scmp.lt.s32.totalorder %s20, 2
      // Predicated region
      $region25: #{tpu_custom_call.1} parent=5 // pred_check
        %p428 = pneg %p427
      $region26: #{tpu_custom_call.1} parent=5 // pred_check_branch
        %430 = sbr.rel (%p428) target = $region28
      $region27: #{tpu_custom_call.1} parent=5 // pred_region
        // Predicated region
        $region29: #{tpu_custom_call.1} parent=27 // pred_check
          %p431 = pneg %p125
        $region30: #{tpu_custom_call.1} parent=27 // pred_check_branch
          %433 = sbr.rel (%p431) target = $region32
        $region31: #{tpu_custom_call.1} parent=27 // pred_region
          %p434 = scmp.lt.s32.totalorder %s28, 1
          %s435 = scalar_select %p434, %s28, 1
          %s436 = smul.addr %s435, 4
          %s437 = smul.addr %s436, 4
          %s438 = scalar_lea.vmem %s3, %s437
        $region32: #{tpu_custom_call.1} parent=27 // pred_fallthru
          _
        // Predicated region
        $region33: #{tpu_custom_call.1} parent=27 // pred_check
          %p439 = pneg %p151
        $region34: #{tpu_custom_call.1} parent=27 // pred_check_branch
          %441 = sbr.rel (%p439) target = $region36
        $region35: #{tpu_custom_call.1} parent=27 // pred_region
          %p442 = scmp.lt.s32.totalorder %s28, 1
          %s443 = scalar_select %p442, %s28, 1
          %s444 = scalar_lea.vmem %s4, %s443
        $region36: #{tpu_custom_call.1} parent=27 // pred_fallthru
          _
        // Predicated region
        $region37: #{tpu_custom_call.1} parent=27 // pred_check
          %p445 = pneg %p177
        $region38: #{tpu_custom_call.1} parent=27 // pred_check_branch
          %447 = sbr.rel (%p445) target = $region40
        $region39: #{tpu_custom_call.1} parent=27 // pred_region
          %p448 = scmp.lt.s32.totalorder %s28, 1
          %s449 = scalar_select %p448, %s28, 1
          %s450 = scalar_lea.vmem %s5, %s449
        $region40: #{tpu_custom_call.1} parent=27 // pred_fallthru
          _
        // Predicated region
        $region41: #{tpu_custom_call.1} parent=27 // pred_check
          %p451 = pneg %p203
        $region42: #{tpu_custom_call.1} parent=27 // pred_check_branch
          %453 = sbr.rel (%p451) target = $region44
        $region43: #{tpu_custom_call.1} parent=27 // pred_region
          %p454 = scmp.lt.s32.totalorder %s28, 1
          %s455 = scalar_select %p454, %s28, 1
          %s456 = scalar_lea.vmem %s6, %s455
        $region44: #{tpu_custom_call.1} parent=27 // pred_fallthru
          _
        // Predicated region
        $region45: #{tpu_custom_call.1} parent=27 // pred_check
          %p457 = pneg %p229
        $region46: #{tpu_custom_call.1} parent=27 // pred_check_branch
          %459 = sbr.rel (%p457) target = $region48
        $region47: #{tpu_custom_call.1} parent=27 // pred_region
          %p460 = scmp.lt.s32.totalorder %s28, 1
          %s461 = scalar_select %p460, %s28, 1
          %s462 = smul.addr %s461, 4
          %s463 = smul.addr %s462, 4
          %s464 = scalar_lea.vmem %s7, %s463
        $region48: #{tpu_custom_call.1} parent=27 // pred_fallthru
          _
        // Predicated region
        $region49: #{tpu_custom_call.1} parent=27 // pred_check
          %p465 = pneg %p255
        $region50: #{tpu_custom_call.1} parent=27 // pred_check_branch
          %467 = sbr.rel (%p465) target = $region52
        $region51: #{tpu_custom_call.1} parent=27 // pred_region
          %p468 = scmp.lt.s32.totalorder %s28, 1
          %s469 = scalar_select %p468, %s28, 1
          %s470 = scalar_lea.vmem %s8, %s469
        $region52: #{tpu_custom_call.1} parent=27 // pred_fallthru
          _
        // Predicated region
        $region53: #{tpu_custom_call.1} parent=27 // pred_check
          %p471 = pneg %p281
        $region54: #{tpu_custom_call.1} parent=27 // pred_check_branch
          %473 = sbr.rel (%p471) target = $region56
        $region55: #{tpu_custom_call.1} parent=27 // pred_region
          %p474 = scmp.lt.s32.totalorder %s28, 1
          %s475 = scalar_select %p474, %s28, 1
          %s476 = smul.addr %s475, 16
          %s477 = smul.addr %s476, 4
          %s478 = scalar_lea.vmem %s9, %s477
        $region56: #{tpu_custom_call.1} parent=27 // pred_fallthru
          _
        // Predicated region
        $region57: #{tpu_custom_call.1} parent=27 // pred_check
          %p479 = pneg %p307
        $region58: #{tpu_custom_call.1} parent=27 // pred_check_branch
          %481 = sbr.rel (%p479) target = $region60
        $region59: #{tpu_custom_call.1} parent=27 // pred_region
          %p482 = scmp.lt.s32.totalorder %s28, 1
          %s483 = scalar_select %p482, %s28, 1
          %s484 = scalar_lea.vmem %s10, %s483
        $region60: #{tpu_custom_call.1} parent=27 // pred_fallthru
          _
        // Predicated region
        $region61: #{tpu_custom_call.1} parent=27 // pred_check
          %p485 = pneg %p333
        $region62: #{tpu_custom_call.1} parent=27 // pred_check_branch
          %487 = sbr.rel (%p485) target = $region64
        $region63: #{tpu_custom_call.1} parent=27 // pred_region
          %p488 = scmp.lt.s32.totalorder %s28, 1
          %s489 = scalar_select %p488, %s28, 1
          %s490 = scalar_lea.vmem %s11, %s489
        $region64: #{tpu_custom_call.1} parent=27 // pred_fallthru
          _
        // Predicated region
        $region65: #{tpu_custom_call.1} parent=27 // pred_check
          %p491 = pneg %p359
        $region66: #{tpu_custom_call.1} parent=27 // pred_check_branch
          %493 = sbr.rel (%p491) target = $region68
        $region67: #{tpu_custom_call.1} parent=27 // pred_region
          %p494 = scmp.lt.s32.totalorder %s28, 1
          %s495 = scalar_select %p494, %s28, 1
          %s496 = scalar_lea.vmem %s12, %s495
        $region68: #{tpu_custom_call.1} parent=27 // pred_fallthru
          _
      $region28: #{tpu_custom_call.1} parent=5 // pred_fallthru
        _
      %p497 = scmp.le.s32.totalorder 1, %s20
      %p498 = scmp.lt.s32.totalorder %s20, 3
      %p499 = pnand %p497, %p498
      %p500 = pneg %p499
      // Predicated region
      $region69: #{tpu_custom_call.1} parent=5 // pred_check
        _
      $region70: #{tpu_custom_call.1} parent=5 // pred_check_branch
        %502 = sbr.rel (%p499) target = $region72
      $region71: #{tpu_custom_call.1} parent=5 // pred_region
        %s503 = ssub.s32 %s20, 1
        %s504 = smul.u32 2, %s29
        %p505 = scmp.lt.s32.totalorder %s504, 1
        %s506 = scalar_select %p505, %s504, 1
        %s507 = smul.addr %s506, 8
        %s508 = scalar_lea.vmem %s0, %s507
        %p509 = pneg %p58
        %p510 = pneg %p55
        %s511 = smul.u32 2, %s29
        %p512 = scmp.lt.s32.totalorder %s511, 1
        %s513 = scalar_select %p512, %s511, 1
        %s514 = smul.addr %s513, 2
        %s515 = scalar_lea.vmem %s1, %s514
        %p516 = pneg %p84
        %p517 = pneg %p81
        %p518 = pneg %p105
        %p519 = pneg %p102
        %p520 = scmp.lt.s32.totalorder %s30, 1
        %s521 = scalar_select %p520, %s30, 1
        %s522 = smul.addr %s521, 4
        %s523 = smul.addr %s522, 4
        %s524 = scalar_lea.vmem %s3, %s523
        %p525 = pneg %p131
        %p526 = pneg %p128
        %p527 = scmp.lt.s32.totalorder %s30, 1
        %s528 = scalar_select %p527, %s30, 1
        %s529 = scalar_lea.vmem %s4, %s528
        %p530 = pneg %p157
        %p531 = pneg %p154
        %p532 = scmp.lt.s32.totalorder %s30, 1
        %s533 = scalar_select %p532, %s30, 1
        %s534 = scalar_lea.vmem %s5, %s533
        %p535 = pneg %p183
        %p536 = pneg %p180
        %p537 = scmp.lt.s32.totalorder %s30, 1
        %s538 = scalar_select %p537, %s30, 1
        %s539 = scalar_lea.vmem %s6, %s538
        %p540 = pneg %p209
        %p541 = pneg %p206
        %p542 = scmp.lt.s32.totalorder %s30, 1
        %s543 = scalar_select %p542, %s30, 1
        %s544 = smul.addr %s543, 4
        %s545 = smul.addr %s544, 4
        %s546 = scalar_lea.vmem %s7, %s545
        %p547 = pneg %p235
        %p548 = pneg %p232
        %p549 = scmp.lt.s32.totalorder %s30, 1
        %s550 = scalar_select %p549, %s30, 1
        %s551 = scalar_lea.vmem %s8, %s550
        %p552 = pneg %p261
        %p553 = pneg %p258
        %p554 = scmp.lt.s32.totalorder %s30, 1
        %s555 = scalar_select %p554, %s30, 1
        %s556 = smul.addr %s555, 16
        %s557 = smul.addr %s556, 4
        %s558 = scalar_lea.vmem %s9, %s557
        %p559 = pneg %p287
        %p560 = pneg %p284
        %p561 = scmp.lt.s32.totalorder %s30, 1
        %s562 = scalar_select %p561, %s30, 1
        %s563 = scalar_lea.vmem %s10, %s562
        %p564 = pneg %p313
        %p565 = pneg %p310
        %p566 = scmp.lt.s32.totalorder %s30, 1
        %s567 = scalar_select %p566, %s30, 1
        %s568 = scalar_lea.vmem %s11, %s567
        %p569 = pneg %p339
        %p570 = pneg %p336
        %p571 = scmp.lt.s32.totalorder %s30, 1
        %s572 = scalar_select %p571, %s30, 1
        %s573 = scalar_lea.vmem %s12, %s572
        %p574 = pneg %p365
        %p575 = pneg %p362
        %p576 = pneg %p391
        %p577 = pneg %p388
        %s578 = smul.u32 2, %s29
        %p579 = scmp.lt.s32.totalorder %s578, 1
        %s580 = scalar_select %p579, %s578, 1
        %s581 = smul.addr %s580, 8
        %s582 = scalar_lea.vmem %s0, %s581
        %s583 = smul.u32 2, %s29
        %s584 = smul.u32 2, %s29
        %p585 = scmp.lt.s32.totalorder %s584, 1
        %s586 = scalar_select %p585, %s584, 1
        %s587 = smul.addr %s586, 2
        %s588 = scalar_lea.vmem %s1, %s587
        %s589 = smul.u32 2, %s29
        %p590 = scmp.lt.s32.totalorder %s30, 1
        %s591 = scalar_select %p590, %s30, 1
        %s592 = smul.addr %s591, 4
        %s593 = smul.addr %s592, 4
        %s594 = scalar_lea.vmem %s3, %s593
        %p595 = scmp.lt.s32.totalorder %s30, 1
        %s596 = scalar_select %p595, %s30, 1
        %s597 = scalar_lea.vmem %s4, %s596
        %p598 = scmp.lt.s32.totalorder %s30, 1
        %s599 = scalar_select %p598, %s30, 1
        %s600 = scalar_lea.vmem %s5, %s599
        %p601 = scmp.lt.s32.totalorder %s30, 1
        %s602 = scalar_select %p601, %s30, 1
        %s603 = scalar_lea.vmem %s6, %s602
        %p604 = scmp.lt.s32.totalorder %s30, 1
        %s605 = scalar_select %p604, %s30, 1
        %s606 = smul.addr %s605, 4
        %s607 = smul.addr %s606, 4
        %s608 = scalar_lea.vmem %s7, %s607
        %p609 = scmp.lt.s32.totalorder %s30, 1
        %s610 = scalar_select %p609, %s30, 1
        %s611 = scalar_lea.vmem %s8, %s610
        %p612 = scmp.lt.s32.totalorder %s30, 1
        %s613 = scalar_select %p612, %s30, 1
        %s614 = smul.addr %s613, 16
        %s615 = smul.addr %s614, 4
        %s616 = scalar_lea.vmem %s9, %s615
        %p617 = scmp.lt.s32.totalorder %s30, 1
        %s618 = scalar_select %p617, %s30, 1
        %s619 = scalar_lea.vmem %s10, %s618
        %p620 = scmp.lt.s32.totalorder %s30, 1
        %s621 = scalar_select %p620, %s30, 1
        %s622 = scalar_lea.vmem %s11, %s621
        %p623 = scmp.lt.s32.totalorder %s30, 1
        %s624 = scalar_select %p623, %s30, 1
        %s625 = scalar_lea.vmem %s12, %s624
        %s626 = smul.u32 2, %s29
        %p628 = scmp.eq.s32.totalorder %s30, 0
        // Predicated region
        $region73: #{tpu_custom_call.1} parent=71 // pred_check
          %p629 = pneg %p628
        $region74: #{tpu_custom_call.1} parent=71 // pred_check_branch
          %631 = sbr.rel (%p629) target = $region76
        $region75: #{tpu_custom_call.1} parent=71 // pred_region
          %v632 = vld [vmem:[%s582] sm:$0xff]
          %v633 = vld [vmem:[%s582 + $0x8] sm:$0xff]
          %vm634 = vcmask 261120
          %635 = vst.msk [vmem:[#allocation2] sm:$0xff] %vm634, %v632
          %636 = vst.msk [vmem:[#allocation2 + $0x8] sm:$0xff] %vm634, %v633
        $region76: #{tpu_custom_call.1} parent=71 // pred_fallthru
          _
        %v637 = vld [vmem:[#allocation2] sm:$0xff]
        %v638 = vld [vmem:[#allocation2 + $0x8] sm:$0xff]
        %v639 = vld [vmem:[%s588] sm:$0x3]
        %v640 = vld [vmem:[%s588 + $0x2] sm:$0x3]
        %v641 = vunpack.c.0.s8 %v639
        %v642 = vunpack.c.0.s8 %v640
        %v643 = vcvt.s32.f32 %v641
        %v644 = vcvt.s32.f32 %v642
        %v645 = vld [vmem:[%s2] sm:$0xf]
        %v648 = vunpack.c.l.s4 1966171168
        %v649 = vunpack.c.0.s8 %v648
        %v650 = vlaneseq
        %v651 = vshrl.u32 %v650, 7
        %v652 = vsub.s32 %v649, %v651
        %v653 = vrot.slane %v645, %v652
        %v654 = vcombine.high %v653, %v653
        %v656 = vunpack.c.l.s4 1966171168
        %v657 = vunpack.c.0.s8 %v656
        %v658 = vlaneseq
        %v659 = vshrl.u32 %v658, 7
        %v660 = vsub.s32 %v657, %v659
        %v661 = vrot.slane %v653, %v660
        %v663 = vunpack.c.l.s4 1966171168
        %v664 = vunpack.c.0.s8 %v663
        %v665 = vlaneseq
        %v666 = vshrl.u32 %v665, 7
        %v667 = vsub.s32 %v664, %v666
        %v668 = vrot.slane %v654, %v667
        %v669 = vcombine.high %v661, %v661
        %v670 = vcombine.high %v668, %v668
        %v671 = vlaneseq
        %v672 = vshrl.u32 %v671, 7
        %v673 = vsub.s32 0, %v672
        %v674 = vrot.slane %v661, %v673
        %v675 = vlaneseq
        %v676 = vshrl.u32 %v675, 7
        %v677 = vsub.s32 0, %v676
        %v678 = vrot.slane %v668, %v677
        %v679 = vlaneseq
        %v680 = vshrl.u32 %v679, 7
        %v681 = vsub.s32 0, %v680
        %v682 = vrot.slane %v669, %v681
        %v683 = vlaneseq
        %v684 = vshrl.u32 %v683, 7
        %v685 = vsub.s32 0, %v684
        %v686 = vrot.slane %v670, %v685
        %v691 = vmul.f32 %v637, %v674
        %v692 = vmul.f32 %v637, %v678
        %v693 = vmul.f32 %v637, %v682
        %v694 = vmul.f32 %v637, %v686
        %v695 = vmul.f32 %v638, %v674
        %v696 = vmul.f32 %v638, %v678
        %v697 = vmul.f32 %v638, %v682
        %v698 = vmul.f32 %v638, %v686
        %v699 = vmul.f32 %v637, 0.17677669
        %v700 = vmul.f32 %v638, 0.17677669
        %v701 = vpack.c.bf16 %v691, %v691
        %v702 = vpack.c.bf16 %v692, %v692
        %v703 = vpack.c.bf16 %v693, %v693
        %v704 = vpack.c.bf16 %v694, %v694
        %v705 = vpack.c.bf16 %v695, %v695
        %v706 = vpack.c.bf16 %v696, %v696
        %v707 = vpack.c.bf16 %v697, %v697
        %v708 = vpack.c.bf16 %v698, %v698
        %v709 = vpack.c.bf16 %v699, %v699
        %v710 = vpack.c.bf16 %v700, %v700
        %vm711 = vcmask 261120
        %v713 = vsel %vm711, %v709, 0
        %v716 = vsel %vm711, %v701, 0
        %718 = vmatprep.subr.bf16.mxu0 0
        %719 = vmatpush1.bf16.xpose.msra.mxu0 0
        %720 = vmatprep.subr.bf16.mxu0 0
        %721 = vmatpush1.bf16.xpose.msra.mxu0 0
        %722 = vmatprep.subr.bf16.mxu0 0
        %723 = vmatpush1.bf16.xpose.msra.mxu0 0
        %724 = vmatprep.subr.bf16.mxu0 0
        %725 = vmatpush1.bf16.xpose.msra.mxu0 0
        %726 = vmatprep.subr.bf16.mxu0 0
        %727 = vmatpush1.bf16.xpose.msra.mxu0 0
        %728 = vmatprep.subr.bf16.mxu0 0
        %729 = vmatpush1.bf16.xpose.msra.mxu0 0
        %730 = vmatprep.subr.bf16.mxu0 0
        %731 = vmatpush1.bf16.xpose.msra.mxu0 0
        %732 = vmatprep.subr.bf16.mxu0 0
        %733 = vmatpush1.bf16.xpose.msra.mxu0 %v716
        %734 = vmatprep.subr.bf16.mxu0 0
        %735 = vmatpush2.bf16.xpose.msra.mxu0 0
        %736 = vmatprep.subr.bf16.mxu0 0
        %737 = vmatpush2.bf16.xpose.msra.mxu0 0
        %738 = vmatprep.subr.bf16.mxu0 0
        %739 = vmatpush2.bf16.xpose.msra.mxu0 0
        %740 = vmatprep.subr.bf16.mxu0 0
        %741 = vmatpush2.bf16.xpose.msra.mxu0 0
        %742 = vmatprep.subr.bf16.mxu0 0
        %743 = vmatpush2.bf16.xpose.msra.mxu0 0
        %744 = vmatprep.subr.bf16.mxu0 0
        %745 = vmatpush2.bf16.xpose.msra.mxu0 0
        %746 = vmatprep.subr.bf16.mxu0 0
        %747 = vmatpush2.bf16.xpose.msra.mxu0 0
        %748 = vmatprep.subr.bf16.mxu0 0
        %749 = vmatpush2.bf16.xpose.msra.mxu0 0
        %750 = vmatprep.mubr.bf16.mxu0 0
        %751 = vmatmul.mubr.bf16.gmra.mxu0 %v713
        %v752 = vpop.f32.mrf.mxu0
        %v753 = vadd.f32 0.0, %v752
        %v754 = vpop.f32.mrf.mxu0
        %v755 = vpop.f32.mrf.mxu0
        %v756 = vpop.f32.mrf.mxu0
        %757 = vdwg.mxu0
        %v759 = vsel %vm711, %v702, 0
        %761 = vmatprep.subr.bf16.mxu0 0
        %762 = vmatpush1.bf16.xpose.msra.mxu0 0
        %763 = vmatprep.subr.bf16.mxu0 0
        %764 = vmatpush1.bf16.xpose.msra.mxu0 0
        %765 = vmatprep.subr.bf16.mxu0 0
        %766 = vmatpush1.bf16.xpose.msra.mxu0 0
        %767 = vmatprep.subr.bf16.mxu0 0
        %768 = vmatpush1.bf16.xpose.msra.mxu0 0
        %769 = vmatprep.subr.bf16.mxu0 0
        %770 = vmatpush1.bf16.xpose.msra.mxu0 0
        %771 = vmatprep.subr.bf16.mxu0 0
        %772 = vmatpush1.bf16.xpose.msra.mxu0 0
        %773 = vmatprep.subr.bf16.mxu0 0
        %774 = vmatpush1.bf16.xpose.msra.mxu0 0
        %775 = vmatprep.subr.bf16.mxu0 0
        %776 = vmatpush1.bf16.xpose.msra.mxu0 %v759
        %777 = vmatprep.subr.bf16.mxu0 0
        %778 = vmatpush2.bf16.xpose.msra.mxu0 0
        %779 = vmatprep.subr.bf16.mxu0 0
        %780 = vmatpush2.bf16.xpose.msra.mxu0 0
        %781 = vmatprep.subr.bf16.mxu0 0
        %782 = vmatpush2.bf16.xpose.msra.mxu0 0
        %783 = vmatprep.subr.bf16.mxu0 0
        %784 = vmatpush2.bf16.xpose.msra.mxu0 0
        %785 = vmatprep.subr.bf16.mxu0 0
        %786 = vmatpush2.bf16.xpose.msra.mxu0 0
        %787 = vmatprep.subr.bf16.mxu0 0
        %788 = vmatpush2.bf16.xpose.msra.mxu0 0
        %789 = vmatprep.subr.bf16.mxu0 0
        %790 = vmatpush2.bf16.xpose.msra.mxu0 0
        %791 = vmatprep.subr.bf16.mxu0 0
        %792 = vmatpush2.bf16.xpose.msra.mxu0 0
        %793 = vmatprep.mubr.bf16.mxu0 0
        %794 = vmatmul.mubr.bf16.gmra.mxu0 %v713
        %v795 = vpop.f32.mrf.mxu0
        %v796 = vadd.f32 0.0, %v795
        %v797 = vpop.f32.mrf.mxu0
        %v798 = vpop.f32.mrf.mxu0
        %v799 = vpop.f32.mrf.mxu0
        %800 = vdwg.mxu0
        %v802 = vsel %vm711, %v703, 0
        %804 = vmatprep.subr.bf16.mxu0 0
        %805 = vmatpush1.bf16.xpose.msra.mxu0 0
        %806 = vmatprep.subr.bf16.mxu0 0
        %807 = vmatpush1.bf16.xpose.msra.mxu0 0
        %808 = vmatprep.subr.bf16.mxu0 0
        %809 = vmatpush1.bf16.xpose.msra.mxu0 0
        %810 = vmatprep.subr.bf16.mxu0 0
        %811 = vmatpush1.bf16.xpose.msra.mxu0 0
        %812 = vmatprep.subr.bf16.mxu0 0
        %813 = vmatpush1.bf16.xpose.msra.mxu0 0
        %814 = vmatprep.subr.bf16.mxu0 0
        %815 = vmatpush1.bf16.xpose.msra.mxu0 0
        %816 = vmatprep.subr.bf16.mxu0 0
        %817 = vmatpush1.bf16.xpose.msra.mxu0 0
        %818 = vmatprep.subr.bf16.mxu0 0
        %819 = vmatpush1.bf16.xpose.msra.mxu0 %v802
        %820 = vmatprep.subr.bf16.mxu0 0
        %821 = vmatpush2.bf16.xpose.msra.mxu0 0
        %822 = vmatprep.subr.bf16.mxu0 0
        %823 = vmatpush2.bf16.xpose.msra.mxu0 0
        %824 = vmatprep.subr.bf16.mxu0 0
        %825 = vmatpush2.bf16.xpose.msra.mxu0 0
        %826 = vmatprep.subr.bf16.mxu0 0
        %827 = vmatpush2.bf16.xpose.msra.mxu0 0
        %828 = vmatprep.subr.bf16.mxu0 0
        %829 = vmatpush2.bf16.xpose.msra.mxu0 0
        %830 = vmatprep.subr.bf16.mxu0 0
        %831 = vmatpush2.bf16.xpose.msra.mxu0 0
        %832 = vmatprep.subr.bf16.mxu0 0
        %833 = vmatpush2.bf16.xpose.msra.mxu0 0
        %834 = vmatprep.subr.bf16.mxu0 0
        %835 = vmatpush2.bf16.xpose.msra.mxu0 0
        %836 = vmatprep.mubr.bf16.mxu0 0
        %837 = vmatmul.mubr.bf16.gmra.mxu0 %v713
        %v838 = vpop.f32.mrf.mxu0
        %v839 = vadd.f32 0.0, %v838
        %v840 = vpop.f32.mrf.mxu0
        %v841 = vpop.f32.mrf.mxu0
        %v842 = vpop.f32.mrf.mxu0
        %843 = vdwg.mxu0
        %v845 = vsel %vm711, %v704, 0
        %847 = vmatprep.subr.bf16.mxu0 0
        %848 = vmatpush1.bf16.xpose.msra.mxu0 0
        %849 = vmatprep.subr.bf16.mxu0 0
        %850 = vmatpush1.bf16.xpose.msra.mxu0 0
        %851 = vmatprep.subr.bf16.mxu0 0
        %852 = vmatpush1.bf16.xpose.msra.mxu0 0
        %853 = vmatprep.subr.bf16.mxu0 0
        %854 = vmatpush1.bf16.xpose.msra.mxu0 0
        %855 = vmatprep.subr.bf16.mxu0 0
        %856 = vmatpush1.bf16.xpose.msra.mxu0 0
        %857 = vmatprep.subr.bf16.mxu0 0
        %858 = vmatpush1.bf16.xpose.msra.mxu0 0
        %859 = vmatprep.subr.bf16.mxu0 0
        %860 = vmatpush1.bf16.xpose.msra.mxu0 0
        %861 = vmatprep.subr.bf16.mxu0 0
        %862 = vmatpush1.bf16.xpose.msra.mxu0 %v845
        %863 = vmatprep.subr.bf16.mxu0 0
        %864 = vmatpush2.bf16.xpose.msra.mxu0 0
        %865 = vmatprep.subr.bf16.mxu0 0
        %866 = vmatpush2.bf16.xpose.msra.mxu0 0
        %867 = vmatprep.subr.bf16.mxu0 0
        %868 = vmatpush2.bf16.xpose.msra.mxu0 0
        %869 = vmatprep.subr.bf16.mxu0 0
        %870 = vmatpush2.bf16.xpose.msra.mxu0 0
        %871 = vmatprep.subr.bf16.mxu0 0
        %872 = vmatpush2.bf16.xpose.msra.mxu0 0
        %873 = vmatprep.subr.bf16.mxu0 0
        %874 = vmatpush2.bf16.xpose.msra.mxu0 0
        %875 = vmatprep.subr.bf16.mxu0 0
        %876 = vmatpush2.bf16.xpose.msra.mxu0 0
        %877 = vmatprep.subr.bf16.mxu0 0
        %878 = vmatpush2.bf16.xpose.msra.mxu0 0
        %879 = vmatprep.mubr.bf16.mxu0 0
        %880 = vmatmul.mubr.bf16.gmra.mxu0 %v713
        %v881 = vpop.f32.mrf.mxu0
        %v882 = vadd.f32 0.0, %v881
        %v883 = vpop.f32.mrf.mxu0
        %v884 = vpop.f32.mrf.mxu0
        %v885 = vpop.f32.mrf.mxu0
        %886 = vdwg.mxu0
        %v888 = vsel %vm711, %v710, 0
        %v891 = vsel %vm711, %v705, 0
        %893 = vmatprep.subr.bf16.mxu0 0
        %894 = vmatpush1.bf16.xpose.msra.mxu0 0
        %895 = vmatprep.subr.bf16.mxu0 0
        %896 = vmatpush1.bf16.xpose.msra.mxu0 0
        %897 = vmatprep.subr.bf16.mxu0 0
        %898 = vmatpush1.bf16.xpose.msra.mxu0 0
        %899 = vmatprep.subr.bf16.mxu0 0
        %900 = vmatpush1.bf16.xpose.msra.mxu0 0
        %901 = vmatprep.subr.bf16.mxu0 0
        %902 = vmatpush1.bf16.xpose.msra.mxu0 0
        %903 = vmatprep.subr.bf16.mxu0 0
        %904 = vmatpush1.bf16.xpose.msra.mxu0 0
        %905 = vmatprep.subr.bf16.mxu0 0
        %906 = vmatpush1.bf16.xpose.msra.mxu0 0
        %907 = vmatprep.subr.bf16.mxu0 0
        %908 = vmatpush1.bf16.xpose.msra.mxu0 %v891
        %909 = vmatprep.subr.bf16.mxu0 0
        %910 = vmatpush2.bf16.xpose.msra.mxu0 0
        %911 = vmatprep.subr.bf16.mxu0 0
        %912 = vmatpush2.bf16.xpose.msra.mxu0 0
        %913 = vmatprep.subr.bf16.mxu0 0
        %914 = vmatpush2.bf16.xpose.msra.mxu0 0
        %915 = vmatprep.subr.bf16.mxu0 0
        %916 = vmatpush2.bf16.xpose.msra.mxu0 0
        %917 = vmatprep.subr.bf16.mxu0 0
        %918 = vmatpush2.bf16.xpose.msra.mxu0 0
        %919 = vmatprep.subr.bf16.mxu0 0
        %920 = vmatpush2.bf16.xpose.msra.mxu0 0
        %921 = vmatprep.subr.bf16.mxu0 0
        %922 = vmatpush2.bf16.xpose.msra.mxu0 0
        %923 = vmatprep.subr.bf16.mxu0 0
        %924 = vmatpush2.bf16.xpose.msra.mxu0 0
        %925 = vmatprep.mubr.bf16.mxu0 0
        %926 = vmatmul.mubr.bf16.gmra.mxu0 %v888
        %v927 = vpop.f32.mrf.mxu0
        %v928 = vadd.f32 0.0, %v927
        %v929 = vpop.f32.mrf.mxu0
        %v930 = vpop.f32.mrf.mxu0
        %v931 = vpop.f32.mrf.mxu0
        %932 = vdwg.mxu0
        %v934 = vsel %vm711, %v706, 0
        %936 = vmatprep.subr.bf16.mxu0 0
        %937 = vmatpush1.bf16.xpose.msra.mxu0 0
        %938 = vmatprep.subr.bf16.mxu0 0
        %939 = vmatpush1.bf16.xpose.msra.mxu0 0
        %940 = vmatprep.subr.bf16.mxu0 0
        %941 = vmatpush1.bf16.xpose.msra.mxu0 0
        %942 = vmatprep.subr.bf16.mxu0 0
        %943 = vmatpush1.bf16.xpose.msra.mxu0 0
        %944 = vmatprep.subr.bf16.mxu0 0
        %945 = vmatpush1.bf16.xpose.msra.mxu0 0
        %946 = vmatprep.subr.bf16.mxu0 0
        %947 = vmatpush1.bf16.xpose.msra.mxu0 0
        %948 = vmatprep.subr.bf16.mxu0 0
        %949 = vmatpush1.bf16.xpose.msra.mxu0 0
        %950 = vmatprep.subr.bf16.mxu0 0
        %951 = vmatpush1.bf16.xpose.msra.mxu0 %v934
        %952 = vmatprep.subr.bf16.mxu0 0
        %953 = vmatpush2.bf16.xpose.msra.mxu0 0
        %954 = vmatprep.subr.bf16.mxu0 0
        %955 = vmatpush2.bf16.xpose.msra.mxu0 0
        %956 = vmatprep.subr.bf16.mxu0 0
        %957 = vmatpush2.bf16.xpose.msra.mxu0 0
        %958 = vmatprep.subr.bf16.mxu0 0
        %959 = vmatpush2.bf16.xpose.msra.mxu0 0
        %960 = vmatprep.subr.bf16.mxu0 0
        %961 = vmatpush2.bf16.xpose.msra.mxu0 0
        %962 = vmatprep.subr.bf16.mxu0 0
        %963 = vmatpush2.bf16.xpose.msra.mxu0 0
        %964 = vmatprep.subr.bf16.mxu0 0
        %965 = vmatpush2.bf16.xpose.msra.mxu0 0
        %966 = vmatprep.subr.bf16.mxu0 0
        %967 = vmatpush2.bf16.xpose.msra.mxu0 0
        %968 = vmatprep.mubr.bf16.mxu0 0
        %969 = vmatmul.mubr.bf16.gmra.mxu0 %v888
        %v970 = vpop.f32.mrf.mxu0
        %v971 = vadd.f32 0.0, %v970
        %v972 = vpop.f32.mrf.mxu0
        %v973 = vpop.f32.mrf.mxu0
        %v974 = vpop.f32.mrf.mxu0
        %975 = vdwg.mxu0
        %v977 = vsel %vm711, %v707, 0
        %979 = vmatprep.subr.bf16.mxu0 0
        %980 = vmatpush1.bf16.xpose.msra.mxu0 0
        %981 = vmatprep.subr.bf16.mxu0 0
        %982 = vmatpush1.bf16.xpose.msra.mxu0 0
        %983 = vmatprep.subr.bf16.mxu0 0
        %984 = vmatpush1.bf16.xpose.msra.mxu0 0
        %985 = vmatprep.subr.bf16.mxu0 0
        %986 = vmatpush1.bf16.xpose.msra.mxu0 0
        %987 = vmatprep.subr.bf16.mxu0 0
        %988 = vmatpush1.bf16.xpose.msra.mxu0 0
        %989 = vmatprep.subr.bf16.mxu0 0
        %990 = vmatpush1.bf16.xpose.msra.mxu0 0
        %991 = vmatprep.subr.bf16.mxu0 0
        %992 = vmatpush1.bf16.xpose.msra.mxu0 0
        %993 = vmatprep.subr.bf16.mxu0 0
        %994 = vmatpush1.bf16.xpose.msra.mxu0 %v977
        %995 = vmatprep.subr.bf16.mxu0 0
        %996 = vmatpush2.bf16.xpose.msra.mxu0 0
        %997 = vmatprep.subr.bf16.mxu0 0
        %998 = vmatpush2.bf16.xpose.msra.mxu0 0
        %999 = vmatprep.subr.bf16.mxu0 0
        %1000 = vmatpush2.bf16.xpose.msra.mxu0 0
        %1001 = vmatprep.subr.bf16.mxu0 0
        %1002 = vmatpush2.bf16.xpose.msra.mxu0 0
        %1003 = vmatprep.subr.bf16.mxu0 0
        %1004 = vmatpush2.bf16.xpose.msra.mxu0 0
        %1005 = vmatprep.subr.bf16.mxu0 0
        %1006 = vmatpush2.bf16.xpose.msra.mxu0 0
        %1007 = vmatprep.subr.bf16.mxu0 0
        %1008 = vmatpush2.bf16.xpose.msra.mxu0 0
        %1009 = vmatprep.subr.bf16.mxu0 0
        %1010 = vmatpush2.bf16.xpose.msra.mxu0 0
        %1011 = vmatprep.mubr.bf16.mxu0 0
        %1012 = vmatmul.mubr.bf16.gmra.mxu0 %v888
        %v1013 = vpop.f32.mrf.mxu0
        %v1014 = vadd.f32 0.0, %v1013
        %v1015 = vpop.f32.mrf.mxu0
        %v1016 = vpop.f32.mrf.mxu0
        %v1017 = vpop.f32.mrf.mxu0
        %1018 = vdwg.mxu0
        %v1020 = vsel %vm711, %v708, 0
        %1022 = vmatprep.subr.bf16.mxu0 0
        %1023 = vmatpush1.bf16.xpose.msra.mxu0 0
        %1024 = vmatprep.subr.bf16.mxu0 0
        %1025 = vmatpush1.bf16.xpose.msra.mxu0 0
        %1026 = vmatprep.subr.bf16.mxu0 0
        %1027 = vmatpush1.bf16.xpose.msra.mxu0 0
        %1028 = vmatprep.subr.bf16.mxu0 0
        %1029 = vmatpush1.bf16.xpose.msra.mxu0 0
        %1030 = vmatprep.subr.bf16.mxu0 0
        %1031 = vmatpush1.bf16.xpose.msra.mxu0 0
        %1032 = vmatprep.subr.bf16.mxu0 0
        %1033 = vmatpush1.bf16.xpose.msra.mxu0 0
        %1034 = vmatprep.subr.bf16.mxu0 0
        %1035 = vmatpush1.bf16.xpose.msra.mxu0 0
        %1036 = vmatprep.subr.bf16.mxu0 0
        %1037 = vmatpush1.bf16.xpose.msra.mxu0 %v1020
        %1038 = vmatprep.subr.bf16.mxu0 0
        %1039 = vmatpush2.bf16.xpose.msra.mxu0 0
        %1040 = vmatprep.subr.bf16.mxu0 0
        %1041 = vmatpush2.bf16.xpose.msra.mxu0 0
        %1042 = vmatprep.subr.bf16.mxu0 0
        %1043 = vmatpush2.bf16.xpose.msra.mxu0 0
        %1044 = vmatprep.subr.bf16.mxu0 0
        %1045 = vmatpush2.bf16.xpose.msra.mxu0 0
        %1046 = vmatprep.subr.bf16.mxu0 0
        %1047 = vmatpush2.bf16.xpose.msra.mxu0 0
        %1048 = vmatprep.subr.bf16.mxu0 0
        %1049 = vmatpush2.bf16.xpose.msra.mxu0 0
        %1050 = vmatprep.subr.bf16.mxu0 0
        %1051 = vmatpush2.bf16.xpose.msra.mxu0 0
        %1052 = vmatprep.subr.bf16.mxu0 0
        %1053 = vmatpush2.bf16.xpose.msra.mxu0 0
        %1054 = vmatprep.mubr.bf16.mxu0 0
        %1055 = vmatmul.mubr.bf16.gmra.mxu0 %v888
        %v1056 = vpop.f32.mrf.mxu0
        %v1057 = vadd.f32 0.0, %v1056
        %v1058 = vpop.f32.mrf.mxu0
        %v1059 = vpop.f32.mrf.mxu0
        %v1060 = vpop.f32.mrf.mxu0
        %1061 = vdwg.mxu0
        %vm1062 = vcmp.ne.f32.partialorder %v643, 0.0
        %vm1063 = vcmp.ne.f32.partialorder %v644, 0.0
        %v1064 = vsel %vm1062, %v753, -176.7767
        %v1065 = vsel %vm1062, %v796, -176.7767
        %v1066 = vsel %vm1062, %v839, -176.7767
        %v1067 = vsel %vm1062, %v882, -176.7767
        %v1068 = vsel %vm1063, %v928, -176.7767
        %v1069 = vsel %vm1063, %v971, -176.7767
        %v1070 = vsel %vm1063, %v1014, -176.7767
        %v1071 = vsel %vm1063, %v1057, -176.7767
        %vm1072 = vcmask 64512
        %v1073 = vsel %vm1072, %v1064, -inf
        %1074 = vmax.xlane.f32.xlu0 %v1073
        %v1075 = vpop.xlane.xlu0 %1074
        %v1076 = vsel %vm1072, %v1065, -inf
        %1077 = vmax.xlane.f32.xlu0 %v1076
        %v1078 = vpop.xlane.xlu0 %1077
        %v1079 = vsel %vm1072, %v1066, -inf
        %1080 = vmax.xlane.f32.xlu0 %v1079
        %v1081 = vpop.xlane.xlu0 %1080
        %v1082 = vsel %vm1072, %v1067, -inf
        %1083 = vmax.xlane.f32.xlu0 %v1082
        %v1084 = vpop.xlane.xlu0 %1083
        %v1085 = vsel %vm1072, %v1068, -inf
        %1086 = vmax.xlane.f32.xlu0 %v1085
        %v1087 = vpop.xlane.xlu0 %1086
        %v1088 = vsel %vm1072, %v1069, -inf
        %1089 = vmax.xlane.f32.xlu0 %v1088
        %v1090 = vpop.xlane.xlu0 %1089
        %v1091 = vsel %vm1072, %v1070, -inf
        %1092 = vmax.xlane.f32.xlu0 %v1091
        %v1093 = vpop.xlane.xlu0 %1092
        %v1094 = vsel %vm1072, %v1071, -inf
        %1095 = vmax.xlane.f32.xlu0 %v1094
        %v1096 = vpop.xlane.xlu0 %1095
        %v1097 = vsub.f32 %v1064, %v1075
        %v1098 = vsub.f32 %v1065, %v1078
        %v1099 = vsub.f32 %v1066, %v1081
        %v1100 = vsub.f32 %v1067, %v1084
        %v1101 = vsub.f32 %v1068, %v1087
        %v1102 = vsub.f32 %v1069, %v1090
        %v1103 = vsub.f32 %v1070, %v1093
        %v1104 = vsub.f32 %v1071, %v1096
        %v1105 = vmul.f32 %v1097, 1.442695
        %v1106 = vpow.pop %v1105
        %v1107 = vmul.f32 %v1098, 1.442695
        %v1108 = vpow.pop %v1107
        %v1109 = vmul.f32 %v1099, 1.442695
        %v1110 = vpow.pop %v1109
        %v1111 = vmul.f32 %v1100, 1.442695
        %v1112 = vpow.pop %v1111
        %v1113 = vmul.f32 %v1101, 1.442695
        %v1114 = vpow.pop %v1113
        %v1115 = vmul.f32 %v1102, 1.442695
        %v1116 = vpow.pop %v1115
        %v1117 = vmul.f32 %v1103, 1.442695
        %v1118 = vpow.pop %v1117
        %v1119 = vmul.f32 %v1104, 1.442695
        %v1120 = vpow.pop %v1119
        %v1121 = vsel %vm1072, %v1106, 0.0
        %1122 = vadd.xlane.f32.xlu0 %v1121
        %v1123 = vpop.xlane.xlu0 %1122
        %v1124 = vsel %vm1072, %v1108, 0.0
        %1125 = vadd.xlane.f32.xlu0 %v1124
        %v1126 = vpop.xlane.xlu0 %1125
        %v1127 = vsel %vm1072, %v1110, 0.0
        %1128 = vadd.xlane.f32.xlu0 %v1127
        %v1129 = vpop.xlane.xlu0 %1128
        %v1130 = vsel %vm1072, %v1112, 0.0
        %1131 = vadd.xlane.f32.xlu0 %v1130
        %v1132 = vpop.xlane.xlu0 %1131
        %v1133 = vsel %vm1072, %v1114, 0.0
        %1134 = vadd.xlane.f32.xlu0 %v1133
        %v1135 = vpop.xlane.xlu0 %1134
        %v1136 = vsel %vm1072, %v1116, 0.0
        %1137 = vadd.xlane.f32.xlu0 %v1136
        %v1138 = vpop.xlane.xlu0 %1137
        %v1139 = vsel %vm1072, %v1118, 0.0
        %1140 = vadd.xlane.f32.xlu0 %v1139
        %v1141 = vpop.xlane.xlu0 %1140
        %v1142 = vsel %vm1072, %v1120, 0.0
        %1143 = vadd.xlane.f32.xlu0 %v1142
        %v1144 = vpop.xlane.xlu0 %1143
        %v1145 = vrcp.pop %v1123
        %v1146 = vrcp.pop %v1126
        %v1147 = vrcp.pop %v1129
        %v1148 = vrcp.pop %v1132
        %v1149 = vrcp.pop %v1135
        %v1150 = vrcp.pop %v1138
        %v1151 = vrcp.pop %v1141
        %v1152 = vrcp.pop %v1144
        %v1153 = vmul.f32 %v1106, %v1145
        %v1154 = vmul.f32 %v1108, %v1146
        %v1155 = vmul.f32 %v1110, %v1147
        %v1156 = vmul.f32 %v1112, %v1148
        %v1157 = vmul.f32 %v1114, %v1149
        %v1158 = vmul.f32 %v1116, %v1150
        %v1159 = vmul.f32 %v1118, %v1151
        %v1160 = vmul.f32 %v1120, %v1152
        %v1161 = vpack.c.bf16 %v1153, %v1153
        %v1162 = vpack.c.bf16 %v1154, %v1154
        %v1163 = vpack.c.bf16 %v1155, %v1155
        %v1164 = vpack.c.bf16 %v1156, %v1156
        %v1165 = vpack.c.bf16 %v1157, %v1157
        %v1166 = vpack.c.bf16 %v1158, %v1158
        %v1167 = vpack.c.bf16 %v1159, %v1159
        %v1168 = vpack.c.bf16 %v1160, %v1160
        %v1170 = vsel %vm1072, %v1161, 0
        %vm1172 = vcmask 1043456
        %v1173 = vsel %vm1172, %v701, 0
        %1175 = vmatprep.subr.bf16.mxu0 0
        %1176 = vmatpush1.bf16.msra.mxu0 0
        %1177 = vmatprep.subr.bf16.mxu0 0
        %1178 = vmatpush1.bf16.msra.mxu0 0
        %1179 = vmatprep.subr.bf16.mxu0 0
        %1180 = vmatpush1.bf16.msra.mxu0 0
        %1181 = vmatprep.subr.bf16.mxu0 0
        %1182 = vmatpush1.bf16.msra.mxu0 0
        %1183 = vmatprep.subr.bf16.mxu0 0
        %1184 = vmatpush1.bf16.msra.mxu0 0
        %1185 = vmatprep.subr.bf16.mxu0 0
        %1186 = vmatpush1.bf16.msra.mxu0 0
        %1187 = vmatprep.subr.bf16.mxu0 0
        %1188 = vmatpush1.bf16.msra.mxu0 0
        %1189 = vmatprep.subr.bf16.mxu0 0
        %1190 = vmatpush1.bf16.msra.mxu0 %v1173
        %1191 = vmatprep.subr.bf16.mxu0 0
        %1192 = vmatpush2.bf16.msra.mxu0 0
        %1193 = vmatprep.subr.bf16.mxu0 0
        %1194 = vmatpush2.bf16.msra.mxu0 0
        %1195 = vmatprep.subr.bf16.mxu0 0
        %1196 = vmatpush2.bf16.msra.mxu0 0
        %1197 = vmatprep.subr.bf16.mxu0 0
        %1198 = vmatpush2.bf16.msra.mxu0 0
        %1199 = vmatprep.subr.bf16.mxu0 0
        %1200 = vmatpush2.bf16.msra.mxu0 0
        %1201 = vmatprep.subr.bf16.mxu0 0
        %1202 = vmatpush2.bf16.msra.mxu0 0
        %1203 = vmatprep.subr.bf16.mxu0 0
        %1204 = vmatpush2.bf16.msra.mxu0 0
        %1205 = vmatprep.subr.bf16.mxu0 0
        %1206 = vmatpush2.bf16.msra.mxu0 0
        %1207 = vmatprep.mubr.bf16.mxu0 0
        %1208 = vmatmul.mubr.bf16.gmra.mxu0 %v1170
        %v1209 = vpop.f32.mrf.mxu0
        %v1210 = vadd.f32 0.0, %v1209
        %v1211 = vpop.f32.mrf.mxu0
        %v1212 = vpop.f32.mrf.mxu0
        %v1213 = vpop.f32.mrf.mxu0
        %1214 = vdwg.mxu0
        %v1216 = vsel %vm1072, %v1162, 0
        %v1218 = vsel %vm1172, %v702, 0
        %1220 = vmatprep.subr.bf16.mxu0 0
        %1221 = vmatpush1.bf16.msra.mxu0 0
        %1222 = vmatprep.subr.bf16.mxu0 0
        %1223 = vmatpush1.bf16.msra.mxu0 0
        %1224 = vmatprep.subr.bf16.mxu0 0
        %1225 = vmatpush1.bf16.msra.mxu0 0
        %1226 = vmatprep.subr.bf16.mxu0 0
        %1227 = vmatpush1.bf16.msra.mxu0 0
        %1228 = vmatprep.subr.bf16.mxu0 0
        %1229 = vmatpush1.bf16.msra.mxu0 0
        %1230 = vmatprep.subr.bf16.mxu0 0
        %1231 = vmatpush1.bf16.msra.mxu0 0
        %1232 = vmatprep.subr.bf16.mxu0 0
        %1233 = vmatpush1.bf16.msra.mxu0 0
        %1234 = vmatprep.subr.bf16.mxu0 0
        %1235 = vmatpush1.bf16.msra.mxu0 %v1218
        %1236 = vmatprep.subr.bf16.mxu0 0
        %1237 = vmatpush2.bf16.msra.mxu0 0
        %1238 = vmatprep.subr.bf16.mxu0 0
        %1239 = vmatpush2.bf16.msra.mxu0 0
        %1240 = vmatprep.subr.bf16.mxu0 0
        %1241 = vmatpush2.bf16.msra.mxu0 0
        %1242 = vmatprep.subr.bf16.mxu0 0
        %1243 = vmatpush2.bf16.msra.mxu0 0
        %1244 = vmatprep.subr.bf16.mxu0 0
        %1245 = vmatpush2.bf16.msra.mxu0 0
        %1246 = vmatprep.subr.bf16.mxu0 0
        %1247 = vmatpush2.bf16.msra.mxu0 0
        %1248 = vmatprep.subr.bf16.mxu0 0
        %1249 = vmatpush2.bf16.msra.mxu0 0
        %1250 = vmatprep.subr.bf16.mxu0 0
        %1251 = vmatpush2.bf16.msra.mxu0 0
        %1252 = vmatprep.mubr.bf16.mxu0 0
        %1253 = vmatmul.mubr.bf16.gmra.mxu0 %v1216
        %v1254 = vpop.f32.mrf.mxu0
        %v1255 = vadd.f32 0.0, %v1254
        %v1256 = vpop.f32.mrf.mxu0
        %v1257 = vpop.f32.mrf.mxu0
        %v1258 = vpop.f32.mrf.mxu0
        %1259 = vdwg.mxu0
        %v1261 = vsel %vm1072, %v1163, 0
        %v1263 = vsel %vm1172, %v703, 0
        %1265 = vmatprep.subr.bf16.mxu0 0
        %1266 = vmatpush1.bf16.msra.mxu0 0
        %1267 = vmatprep.subr.bf16.mxu0 0
        %1268 = vmatpush1.bf16.msra.mxu0 0
        %1269 = vmatprep.subr.bf16.mxu0 0
        %1270 = vmatpush1.bf16.msra.mxu0 0
        %1271 = vmatprep.subr.bf16.mxu0 0
        %1272 = vmatpush1.bf16.msra.mxu0 0
        %1273 = vmatprep.subr.bf16.mxu0 0
        %1274 = vmatpush1.bf16.msra.mxu0 0
        %1275 = vmatprep.subr.bf16.mxu0 0
        %1276 = vmatpush1.bf16.msra.mxu0 0
        %1277 = vmatprep.subr.bf16.mxu0 0
        %1278 = vmatpush1.bf16.msra.mxu0 0
        %1279 = vmatprep.subr.bf16.mxu0 0
        %1280 = vmatpush1.bf16.msra.mxu0 %v1263
        %1281 = vmatprep.subr.bf16.mxu0 0
        %1282 = vmatpush2.bf16.msra.mxu0 0
        %1283 = vmatprep.subr.bf16.mxu0 0
        %1284 = vmatpush2.bf16.msra.mxu0 0
        %1285 = vmatprep.subr.bf16.mxu0 0
        %1286 = vmatpush2.bf16.msra.mxu0 0
        %1287 = vmatprep.subr.bf16.mxu0 0
        %1288 = vmatpush2.bf16.msra.mxu0 0
        %1289 = vmatprep.subr.bf16.mxu0 0
        %1290 = vmatpush2.bf16.msra.mxu0 0
        %1291 = vmatprep.subr.bf16.mxu0 0
        %1292 = vmatpush2.bf16.msra.mxu0 0
        %1293 = vmatprep.subr.bf16.mxu0 0
        %1294 = vmatpush2.bf16.msra.mxu0 0
        %1295 = vmatprep.subr.bf16.mxu0 0
        %1296 = vmatpush2.bf16.msra.mxu0 0
        %1297 = vmatprep.mubr.bf16.mxu0 0
        %1298 = vmatmul.mubr.bf16.gmra.mxu0 %v1261
        %v1299 = vpop.f32.mrf.mxu0
        %v1300 = vadd.f32 0.0, %v1299
        %v1301 = vpop.f32.mrf.mxu0
        %v1302 = vpop.f32.mrf.mxu0
        %v1303 = vpop.f32.mrf.mxu0
        %1304 = vdwg.mxu0
        %v1306 = vsel %vm1072, %v1164, 0
        %v1308 = vsel %vm1172, %v704, 0
        %1310 = vmatprep.subr.bf16.mxu0 0
        %1311 = vmatpush1.bf16.msra.mxu0 0
        %1312 = vmatprep.subr.bf16.mxu0 0
        %1313 = vmatpush1.bf16.msra.mxu0 0
        %1314 = vmatprep.subr.bf16.mxu0 0
        %1315 = vmatpush1.bf16.msra.mxu0 0
        %1316 = vmatprep.subr.bf16.mxu0 0
        %1317 = vmatpush1.bf16.msra.mxu0 0
        %1318 = vmatprep.subr.bf16.mxu0 0
        %1319 = vmatpush1.bf16.msra.mxu0 0
        %1320 = vmatprep.subr.bf16.mxu0 0
        %1321 = vmatpush1.bf16.msra.mxu0 0
        %1322 = vmatprep.subr.bf16.mxu0 0
        %1323 = vmatpush1.bf16.msra.mxu0 0
        %1324 = vmatprep.subr.bf16.mxu0 0
        %1325 = vmatpush1.bf16.msra.mxu0 %v1308
        %1326 = vmatprep.subr.bf16.mxu0 0
        %1327 = vmatpush2.bf16.msra.mxu0 0
        %1328 = vmatprep.subr.bf16.mxu0 0
        %1329 = vmatpush2.bf16.msra.mxu0 0
        %1330 = vmatprep.subr.bf16.mxu0 0
        %1331 = vmatpush2.bf16.msra.mxu0 0
        %1332 = vmatprep.subr.bf16.mxu0 0
        %1333 = vmatpush2.bf16.msra.mxu0 0
        %1334 = vmatprep.subr.bf16.mxu0 0
        %1335 = vmatpush2.bf16.msra.mxu0 0
        %1336 = vmatprep.subr.bf16.mxu0 0
        %1337 = vmatpush2.bf16.msra.mxu0 0
        %1338 = vmatprep.subr.bf16.mxu0 0
        %1339 = vmatpush2.bf16.msra.mxu0 0
        %1340 = vmatprep.subr.bf16.mxu0 0
        %1341 = vmatpush2.bf16.msra.mxu0 0
        %1342 = vmatprep.mubr.bf16.mxu0 0
        %1343 = vmatmul.mubr.bf16.gmra.mxu0 %v1306
        %v1344 = vpop.f32.mrf.mxu0
        %v1345 = vadd.f32 0.0, %v1344
        %v1346 = vpop.f32.mrf.mxu0
        %v1347 = vpop.f32.mrf.mxu0
        %v1348 = vpop.f32.mrf.mxu0
        %1349 = vdwg.mxu0
        %v1351 = vsel %vm1072, %v1165, 0
        %v1353 = vsel %vm1172, %v705, 0
        %1355 = vmatprep.subr.bf16.mxu0 0
        %1356 = vmatpush1.bf16.msra.mxu0 0
        %1357 = vmatprep.subr.bf16.mxu0 0
        %1358 = vmatpush1.bf16.msra.mxu0 0
        %1359 = vmatprep.subr.bf16.mxu0 0
        %1360 = vmatpush1.bf16.msra.mxu0 0
        %1361 = vmatprep.subr.bf16.mxu0 0
        %1362 = vmatpush1.bf16.msra.mxu0 0
        %1363 = vmatprep.subr.bf16.mxu0 0
        %1364 = vmatpush1.bf16.msra.mxu0 0
        %1365 = vmatprep.subr.bf16.mxu0 0
        %1366 = vmatpush1.bf16.msra.mxu0 0
        %1367 = vmatprep.subr.bf16.mxu0 0
        %1368 = vmatpush1.bf16.msra.mxu0 0
        %1369 = vmatprep.subr.bf16.mxu0 0
        %1370 = vmatpush1.bf16.msra.mxu0 %v1353
        %1371 = vmatprep.subr.bf16.mxu0 0
        %1372 = vmatpush2.bf16.msra.mxu0 0
        %1373 = vmatprep.subr.bf16.mxu0 0
        %1374 = vmatpush2.bf16.msra.mxu0 0
        %1375 = vmatprep.subr.bf16.mxu0 0
        %1376 = vmatpush2.bf16.msra.mxu0 0
        %1377 = vmatprep.subr.bf16.mxu0 0
        %1378 = vmatpush2.bf16.msra.mxu0 0
        %1379 = vmatprep.subr.bf16.mxu0 0
        %1380 = vmatpush2.bf16.msra.mxu0 0
        %1381 = vmatprep.subr.bf16.mxu0 0
        %1382 = vmatpush2.bf16.msra.mxu0 0
        %1383 = vmatprep.subr.bf16.mxu0 0
        %1384 = vmatpush2.bf16.msra.mxu0 0
        %1385 = vmatprep.subr.bf16.mxu0 0
        %1386 = vmatpush2.bf16.msra.mxu0 0
        %1387 = vmatprep.mubr.bf16.mxu0 0
        %1388 = vmatmul.mubr.bf16.gmra.mxu0 %v1351
        %v1389 = vpop.f32.mrf.mxu0
        %v1390 = vadd.f32 0.0, %v1389
        %v1391 = vpop.f32.mrf.mxu0
        %v1392 = vpop.f32.mrf.mxu0
        %v1393 = vpop.f32.mrf.mxu0
        %1394 = vdwg.mxu0
        %v1396 = vsel %vm1072, %v1166, 0
        %v1398 = vsel %vm1172, %v706, 0
        %1400 = vmatprep.subr.bf16.mxu0 0
        %1401 = vmatpush1.bf16.msra.mxu0 0
        %1402 = vmatprep.subr.bf16.mxu0 0
        %1403 = vmatpush1.bf16.msra.mxu0 0
        %1404 = vmatprep.subr.bf16.mxu0 0
        %1405 = vmatpush1.bf16.msra.mxu0 0
        %1406 = vmatprep.subr.bf16.mxu0 0
        %1407 = vmatpush1.bf16.msra.mxu0 0
        %1408 = vmatprep.subr.bf16.mxu0 0
        %1409 = vmatpush1.bf16.msra.mxu0 0
        %1410 = vmatprep.subr.bf16.mxu0 0
        %1411 = vmatpush1.bf16.msra.mxu0 0
        %1412 = vmatprep.subr.bf16.mxu0 0
        %1413 = vmatpush1.bf16.msra.mxu0 0
        %1414 = vmatprep.subr.bf16.mxu0 0
        %1415 = vmatpush1.bf16.msra.mxu0 %v1398
        %1416 = vmatprep.subr.bf16.mxu0 0
        %1417 = vmatpush2.bf16.msra.mxu0 0
        %1418 = vmatprep.subr.bf16.mxu0 0
        %1419 = vmatpush2.bf16.msra.mxu0 0
        %1420 = vmatprep.subr.bf16.mxu0 0
        %1421 = vmatpush2.bf16.msra.mxu0 0
        %1422 = vmatprep.subr.bf16.mxu0 0
        %1423 = vmatpush2.bf16.msra.mxu0 0
        %1424 = vmatprep.subr.bf16.mxu0 0
        %1425 = vmatpush2.bf16.msra.mxu0 0
        %1426 = vmatprep.subr.bf16.mxu0 0
        %1427 = vmatpush2.bf16.msra.mxu0 0
        %1428 = vmatprep.subr.bf16.mxu0 0
        %1429 = vmatpush2.bf16.msra.mxu0 0
        %1430 = vmatprep.subr.bf16.mxu0 0
        %1431 = vmatpush2.bf16.msra.mxu0 0
        %1432 = vmatprep.mubr.bf16.mxu0 0
        %1433 = vmatmul.mubr.bf16.gmra.mxu0 %v1396
        %v1434 = vpop.f32.mrf.mxu0
        %v1435 = vadd.f32 0.0, %v1434
        %v1436 = vpop.f32.mrf.mxu0
        %v1437 = vpop.f32.mrf.mxu0
        %v1438 = vpop.f32.mrf.mxu0
        %1439 = vdwg.mxu0
        %v1441 = vsel %vm1072, %v1167, 0
        %v1443 = vsel %vm1172, %v707, 0
        %1445 = vmatprep.subr.bf16.mxu0 0
        %1446 = vmatpush1.bf16.msra.mxu0 0
        %1447 = vmatprep.subr.bf16.mxu0 0
        %1448 = vmatpush1.bf16.msra.mxu0 0
        %1449 = vmatprep.subr.bf16.mxu0 0
        %1450 = vmatpush1.bf16.msra.mxu0 0
        %1451 = vmatprep.subr.bf16.mxu0 0
        %1452 = vmatpush1.bf16.msra.mxu0 0
        %1453 = vmatprep.subr.bf16.mxu0 0
        %1454 = vmatpush1.bf16.msra.mxu0 0
        %1455 = vmatprep.subr.bf16.mxu0 0
        %1456 = vmatpush1.bf16.msra.mxu0 0
        %1457 = vmatprep.subr.bf16.mxu0 0
        %1458 = vmatpush1.bf16.msra.mxu0 0
        %1459 = vmatprep.subr.bf16.mxu0 0
        %1460 = vmatpush1.bf16.msra.mxu0 %v1443
        %1461 = vmatprep.subr.bf16.mxu0 0
        %1462 = vmatpush2.bf16.msra.mxu0 0
        %1463 = vmatprep.subr.bf16.mxu0 0
        %1464 = vmatpush2.bf16.msra.mxu0 0
        %1465 = vmatprep.subr.bf16.mxu0 0
        %1466 = vmatpush2.bf16.msra.mxu0 0
        %1467 = vmatprep.subr.bf16.mxu0 0
        %1468 = vmatpush2.bf16.msra.mxu0 0
        %1469 = vmatprep.subr.bf16.mxu0 0
        %1470 = vmatpush2.bf16.msra.mxu0 0
        %1471 = vmatprep.subr.bf16.mxu0 0
        %1472 = vmatpush2.bf16.msra.mxu0 0
        %1473 = vmatprep.subr.bf16.mxu0 0
        %1474 = vmatpush2.bf16.msra.mxu0 0
        %1475 = vmatprep.subr.bf16.mxu0 0
        %1476 = vmatpush2.bf16.msra.mxu0 0
        %1477 = vmatprep.mubr.bf16.mxu0 0
        %1478 = vmatmul.mubr.bf16.gmra.mxu0 %v1441
        %v1479 = vpop.f32.mrf.mxu0
        %v1480 = vadd.f32 0.0, %v1479
        %v1481 = vpop.f32.mrf.mxu0
        %v1482 = vpop.f32.mrf.mxu0
        %v1483 = vpop.f32.mrf.mxu0
        %1484 = vdwg.mxu0
        %v1486 = vsel %vm1072, %v1168, 0
        %v1488 = vsel %vm1172, %v708, 0
        %1490 = vmatprep.subr.bf16.mxu0 0
        %1491 = vmatpush1.bf16.msra.mxu0 0
        %1492 = vmatprep.subr.bf16.mxu0 0
        %1493 = vmatpush1.bf16.msra.mxu0 0
        %1494 = vmatprep.subr.bf16.mxu0 0
        %1495 = vmatpush1.bf16.msra.mxu0 0
        %1496 = vmatprep.subr.bf16.mxu0 0
        %1497 = vmatpush1.bf16.msra.mxu0 0
        %1498 = vmatprep.subr.bf16.mxu0 0
        %1499 = vmatpush1.bf16.msra.mxu0 0
        %1500 = vmatprep.subr.bf16.mxu0 0
        %1501 = vmatpush1.bf16.msra.mxu0 0
        %1502 = vmatprep.subr.bf16.mxu0 0
        %1503 = vmatpush1.bf16.msra.mxu0 0
        %1504 = vmatprep.subr.bf16.mxu0 0
        %1505 = vmatpush1.bf16.msra.mxu0 %v1488
        %1506 = vmatprep.subr.bf16.mxu0 0
        %1507 = vmatpush2.bf16.msra.mxu0 0
        %1508 = vmatprep.subr.bf16.mxu0 0
        %1509 = vmatpush2.bf16.msra.mxu0 0
        %1510 = vmatprep.subr.bf16.mxu0 0
        %1511 = vmatpush2.bf16.msra.mxu0 0
        %1512 = vmatprep.subr.bf16.mxu0 0
        %1513 = vmatpush2.bf16.msra.mxu0 0
        %1514 = vmatprep.subr.bf16.mxu0 0
        %1515 = vmatpush2.bf16.msra.mxu0 0
        %1516 = vmatprep.subr.bf16.mxu0 0
        %1517 = vmatpush2.bf16.msra.mxu0 0
        %1518 = vmatprep.subr.bf16.mxu0 0
        %1519 = vmatpush2.bf16.msra.mxu0 0
        %1520 = vmatprep.subr.bf16.mxu0 0
        %1521 = vmatpush2.bf16.msra.mxu0 0
        %1522 = vmatprep.mubr.bf16.mxu0 0
        %1523 = vmatmul.mubr.bf16.gmra.mxu0 %v1486
        %v1524 = vpop.f32.mrf.mxu0
        %v1525 = vadd.f32 0.0, %v1524
        %v1526 = vpop.f32.mrf.mxu0
        %v1527 = vpop.f32.mrf.mxu0
        %v1528 = vpop.f32.mrf.mxu0
        %1529 = vdwg.mxu0
        %v1530 = vadd.f32 %v1210, %v1255
        %v1531 = vadd.f32 %v1390, %v1435
        %v1532 = vadd.f32 %v1530, %v1300
        %v1533 = vadd.f32 %v1531, %v1480
        %v1534 = vadd.f32 %v1532, %v1345
        %v1535 = vadd.f32 %v1533, %v1525
        %v1536 = vpack.c.bf16 %v1535, %v1534
        %v1537 = vld [vmem:[%s594] sm:$0xf]
        %v1538 = vld [vmem:[%s594 + $0x4] sm:$0xf]
        %v1539 = vld [vmem:[%s594 + $0x8] sm:$0xf]
        %v1540 = vld [vmem:[%s594 + $0xc] sm:$0xf]
        %v1541 = vld [vmem:[%s597] sm:$0x1]
        %v1543 = vlaneseq
        %v1544 = vshrl.u32 %v1543, 7
        %v1545 = vsub.s32 0, %v1544
        %v1546 = vrot.slane %v1541, %v1545
        %v1552 = vunpack.c.l.b16 %v1537
        %v1553 = vunpack.c.l.b16 %v1538
        %v1554 = vunpack.c.l.b16 %v1539
        %v1555 = vunpack.c.l.b16 %v1540
        %v1556 = vpack.c.b16 %v1553, %v1552
        %v1557 = vpack.c.b16 %v1555, %v1554
        %v1561 = vsel %vm711, %v1536, 0
        %1563 = vmatprep.subr.bf16.mxu0 0
        %1564 = vmatpush1.bf16.msra.mxu0 0
        %1565 = vmatprep.subr.bf16.mxu0 0
        %1566 = vmatpush1.bf16.msra.mxu0 0
        %1567 = vmatprep.subr.bf16.mxu0 0
        %1568 = vmatpush1.bf16.msra.mxu0 0
        %1569 = vmatprep.subr.bf16.mxu0 0
        %1570 = vmatpush1.bf16.msra.mxu0 0
        %1571 = vmatprep.subr.bf16.mxu0 0
        %1572 = vmatpush1.bf16.msra.mxu0 0
        %1573 = vmatprep.subr.bf16.mxu0 0
        %1574 = vmatpush1.bf16.msra.mxu0 0
        %1575 = vmatprep.subr.bf16.mxu0 0
        %1576 = vmatpush1.bf16.msra.mxu0 %v1557
        %1577 = vmatprep.subr.bf16.mxu0 0
        %1578 = vmatpush1.bf16.msra.mxu0 %v1556
        %1579 = vmatprep.subr.bf16.mxu0 0
        %1580 = vmatpush2.bf16.msra.mxu0 0
        %1581 = vmatprep.subr.bf16.mxu0 0
        %1582 = vmatpush2.bf16.msra.mxu0 0
        %1583 = vmatprep.subr.bf16.mxu0 0
        %1584 = vmatpush2.bf16.msra.mxu0 0
        %1585 = vmatprep.subr.bf16.mxu0 0
        %1586 = vmatpush2.bf16.msra.mxu0 0
        %1587 = vmatprep.subr.bf16.mxu0 0
        %1588 = vmatpush2.bf16.msra.mxu0 0
        %1589 = vmatprep.subr.bf16.mxu0 0
        %1590 = vmatpush2.bf16.msra.mxu0 0
        %1591 = vmatprep.subr.bf16.mxu0 0
        %1592 = vmatpush2.bf16.msra.mxu0 0
        %1593 = vmatprep.subr.bf16.mxu0 0
        %1594 = vmatpush2.bf16.msra.mxu0 0
        %1595 = vmatprep.mubr.bf16.mxu0 0
        %1596 = vmatmul.mubr.bf16.gmra.mxu0 %v1561
        %v1597 = vpop.f32.mrf.mxu0
        %v1598 = vadd.f32 %v1546, %v1597
        %v1599 = vpop.f32.mrf.mxu0
        %v1600 = vpop.f32.mrf.mxu0
        %v1601 = vadd.f32 %v1546, %v1600
        %v1602 = vpop.f32.mrf.mxu0
        %1603 = vdwg.mxu0
        %v1604 = vadd.f32 %v1598, %v637
        %v1605 = vadd.f32 %v1601, %v638
        %v1606 = vld [vmem:[%s600] sm:$0x1]
        %v1607 = vld [vmem:[%s603] sm:$0x1]
        %v1608 = vsel %vm711, %v1604, 0.0
        %1609 = vadd.xlane.f32.xlu0 %v1608
        %v1610 = vpop.xlane.xlu0 %1609
        %v1611 = vsel %vm711, %v1605, 0.0
        %1612 = vadd.xlane.f32.xlu0 %v1611
        %v1613 = vpop.xlane.xlu0 %1612
        %v1614 = vrcp.pop 32.0
        %v1615 = vmul.f32 %v1610, %v1614
        %v1616 = vmul.f32 %v1613, %v1614
        %v1617 = vsub.f32 %v1604, %v1615
        %v1618 = vsub.f32 %v1605, %v1616
        %v1619 = vmul.f32 %v1617, %v1617
        %v1620 = vmul.f32 %v1618, %v1618
        %v1621 = vsel %vm711, %v1619, 0.0
        %1622 = vadd.xlane.f32.xlu0 %v1621
        %v1623 = vpop.xlane.xlu0 %1622
        %v1624 = vsel %vm711, %v1620, 0.0
        %1625 = vadd.xlane.f32.xlu0 %v1624
        %v1626 = vpop.xlane.xlu0 %1625
        %v1627 = vmul.f32 %v1623, %v1614
        %v1628 = vmul.f32 %v1626, %v1614
        %v1629 = vadd.f32 %v1627, 1e-05
        %v1630 = vadd.f32 %v1628, 1e-05
        %v1631 = vrsqrt.pop %v1629
        %v1632 = vrsqrt.pop %v1630
        %v1633 = vmul.f32 %v1617, %v1631
        %v1634 = vmul.f32 %v1618, %v1632
        %v1636 = vlaneseq
        %v1637 = vshrl.u32 %v1636, 7
        %v1638 = vsub.s32 0, %v1637
        %v1639 = vrot.slane %v1606, %v1638
        %v1641 = vmul.f32 %v1633, %v1639
        %v1642 = vmul.f32 %v1634, %v1639
        %v1644 = vlaneseq
        %v1645 = vshrl.u32 %v1644, 7
        %v1646 = vsub.s32 0, %v1645
        %v1647 = vrot.slane %v1607, %v1646
        %v1649 = vadd.f32 %v1641, %v1647
        %v1650 = vadd.f32 %v1642, %v1647
        %v1651 = vpack.c.bf16 %v1650, %v1649
        %v1652 = vld [vmem:[%s608] sm:$0xf]
        %v1653 = vld [vmem:[%s608 + $0x4] sm:$0xf]
        %v1654 = vld [vmem:[%s608 + $0x8] sm:$0xf]
        %v1655 = vld [vmem:[%s608 + $0xc] sm:$0xf]
        %v1656 = vld [vmem:[%s611] sm:$0x1]
        %v1658 = vlaneseq
        %v1659 = vshrl.u32 %v1658, 7
        %v1660 = vsub.s32 0, %v1659
        %v1661 = vrot.slane %v1656, %v1660
        %v1667 = vunpack.c.l.b16 %v1652
        %v1668 = vunpack.c.l.b16 %v1653
        %v1669 = vunpack.c.l.b16 %v1654
        %v1670 = vunpack.c.l.b16 %v1655
        %v1671 = vpack.c.b16 %v1668, %v1667
        %v1672 = vpack.c.b16 %v1670, %v1669
        %v1676 = vsel %vm711, %v1651, 0
        %1678 = vmatprep.subr.bf16.mxu0 0
        %1679 = vmatpush1.bf16.msra.mxu0 0
        %1680 = vmatprep.subr.bf16.mxu0 0
        %1681 = vmatpush1.bf16.msra.mxu0 0
        %1682 = vmatprep.subr.bf16.mxu0 0
        %1683 = vmatpush1.bf16.msra.mxu0 0
        %1684 = vmatprep.subr.bf16.mxu0 0
        %1685 = vmatpush1.bf16.msra.mxu0 0
        %1686 = vmatprep.subr.bf16.mxu0 0
        %1687 = vmatpush1.bf16.msra.mxu0 0
        %1688 = vmatprep.subr.bf16.mxu0 0
        %1689 = vmatpush1.bf16.msra.mxu0 0
        %1690 = vmatprep.subr.bf16.mxu0 0
        %1691 = vmatpush1.bf16.msra.mxu0 %v1672
        %1692 = vmatprep.subr.bf16.mxu0 0
        %1693 = vmatpush1.bf16.msra.mxu0 %v1671
        %1694 = vmatprep.subr.bf16.mxu0 0
        %1695 = vmatpush2.bf16.msra.mxu0 0
        %1696 = vmatprep.subr.bf16.mxu0 0
        %1697 = vmatpush2.bf16.msra.mxu0 0
        %1698 = vmatprep.subr.bf16.mxu0 0
        %1699 = vmatpush2.bf16.msra.mxu0 0
        %1700 = vmatprep.subr.bf16.mxu0 0
        %1701 = vmatpush2.bf16.msra.mxu0 0
        %1702 = vmatprep.subr.bf16.mxu0 0
        %1703 = vmatpush2.bf16.msra.mxu0 0
        %1704 = vmatprep.subr.bf16.mxu0 0
        %1705 = vmatpush2.bf16.msra.mxu0 0
        %1706 = vmatprep.subr.bf16.mxu0 0
        %1707 = vmatpush2.bf16.msra.mxu0 0
        %1708 = vmatprep.subr.bf16.mxu0 0
        %1709 = vmatpush2.bf16.msra.mxu0 0
        %1710 = vmatprep.mubr.bf16.mxu0 0
        %1711 = vmatmul.mubr.bf16.gmra.mxu0 %v1676
        %v1712 = vpop.f32.mrf.mxu0
        %v1713 = vadd.f32 %v1661, %v1712
        %v1714 = vpop.f32.mrf.mxu0
        %v1715 = vpop.f32.mrf.mxu0
        %v1716 = vadd.f32 %v1661, %v1715
        %v1717 = vpop.f32.mrf.mxu0
        %1718 = vdwg.mxu0
        %v1719 = vmax.f32 %v1713, 0.0
        %v1720 = vmax.f32 %v1716, 0.0
        %v1721 = vpack.c.bf16 %v1720, %v1719
        %v1722 = vld [vmem:[%s616] sm:$0xf]
        %v1723 = vld [vmem:[%s616 + $0x4] sm:$0xf]
        %v1724 = vld [vmem:[%s616 + $0x8] sm:$0xf]
        %v1725 = vld [vmem:[%s616 + $0xc] sm:$0xf]
        %v1726 = vld [vmem:[%s616 + $0x10] sm:$0xf]
        %v1727 = vld [vmem:[%s616 + $0x14] sm:$0xf]
        %v1728 = vld [vmem:[%s616 + $0x18] sm:$0xf]
        %v1729 = vld [vmem:[%s616 + $0x1c] sm:$0xf]
        %v1730 = vld [vmem:[%s616 + $0x20] sm:$0xf]
        %v1731 = vld [vmem:[%s616 + $0x24] sm:$0xf]
        %v1732 = vld [vmem:[%s616 + $0x28] sm:$0xf]
        %v1733 = vld [vmem:[%s616 + $0x2c] sm:$0xf]
        %v1734 = vld [vmem:[%s616 + $0x30] sm:$0xf]
        %v1735 = vld [vmem:[%s616 + $0x34] sm:$0xf]
        %v1736 = vld [vmem:[%s616 + $0x38] sm:$0xf]
        %v1737 = vld [vmem:[%s616 + $0x3c] sm:$0xf]
        %v1738 = vld [vmem:[%s619] sm:$0x1]
        %v1740 = vlaneseq
        %v1741 = vshrl.u32 %v1740, 7
        %v1742 = vsub.s32 0, %v1741
        %v1743 = vrot.slane %v1738, %v1742
        %v1761 = vunpack.c.l.b16 %v1722
        %v1762 = vunpack.c.l.b16 %v1723
        %v1763 = vunpack.c.l.b16 %v1724
        %v1764 = vunpack.c.l.b16 %v1725
        %v1765 = vunpack.c.l.b16 %v1726
        %v1766 = vunpack.c.l.b16 %v1727
        %v1767 = vunpack.c.l.b16 %v1728
        %v1768 = vunpack.c.l.b16 %v1729
        %v1769 = vunpack.c.l.b16 %v1730
        %v1770 = vunpack.c.l.b16 %v1731
        %v1771 = vunpack.c.l.b16 %v1732
        %v1772 = vunpack.c.l.b16 %v1733
        %v1773 = vunpack.c.l.b16 %v1734
        %v1774 = vunpack.c.l.b16 %v1735
        %v1775 = vunpack.c.l.b16 %v1736
        %v1776 = vunpack.c.l.b16 %v1737
        %v1777 = vpack.c.b16 %v1762, %v1761
        %v1778 = vpack.c.b16 %v1764, %v1763
        %v1779 = vpack.c.b16 %v1766, %v1765
        %v1780 = vpack.c.b16 %v1768, %v1767
        %v1781 = vpack.c.b16 %v1770, %v1769
        %v1782 = vpack.c.b16 %v1772, %v1771
        %v1783 = vpack.c.b16 %v1774, %v1773
        %v1784 = vpack.c.b16 %v1776, %v1775
        %1793 = vmatprep.subr.bf16.mxu0 0
        %1794 = vmatpush1.bf16.msra.mxu0 %v1784
        %1795 = vmatprep.subr.bf16.mxu0 0
        %1796 = vmatpush1.bf16.msra.mxu0 %v1783
        %1797 = vmatprep.subr.bf16.mxu0 0
        %1798 = vmatpush1.bf16.msra.mxu0 %v1782
        %1799 = vmatprep.subr.bf16.mxu0 0
        %1800 = vmatpush1.bf16.msra.mxu0 %v1781
        %1801 = vmatprep.subr.bf16.mxu0 0
        %1802 = vmatpush1.bf16.msra.mxu0 %v1780
        %1803 = vmatprep.subr.bf16.mxu0 0
        %1804 = vmatpush1.bf16.msra.mxu0 %v1779
        %1805 = vmatprep.subr.bf16.mxu0 0
        %1806 = vmatpush1.bf16.msra.mxu0 %v1778
        %1807 = vmatprep.subr.bf16.mxu0 0
        %1808 = vmatpush1.bf16.msra.mxu0 %v1777
        %1809 = vmatprep.subr.bf16.mxu0 0
        %1810 = vmatpush2.bf16.msra.mxu0 0
        %1811 = vmatprep.subr.bf16.mxu0 0
        %1812 = vmatpush2.bf16.msra.mxu0 0
        %1813 = vmatprep.subr.bf16.mxu0 0
        %1814 = vmatpush2.bf16.msra.mxu0 0
        %1815 = vmatprep.subr.bf16.mxu0 0
        %1816 = vmatpush2.bf16.msra.mxu0 0
        %1817 = vmatprep.subr.bf16.mxu0 0
        %1818 = vmatpush2.bf16.msra.mxu0 0
        %1819 = vmatprep.subr.bf16.mxu0 0
        %1820 = vmatpush2.bf16.msra.mxu0 0
        %1821 = vmatprep.subr.bf16.mxu0 0
        %1822 = vmatpush2.bf16.msra.mxu0 0
        %1823 = vmatprep.subr.bf16.mxu0 0
        %1824 = vmatpush2.bf16.msra.mxu0 0
        %1825 = vmatprep.mubr.bf16.mxu0 0
        %1826 = vmatmul.mubr.bf16.gmra.mxu0 %v1721
        %v1827 = vpop.f32.mrf.mxu0
        %v1828 = vadd.f32 %v1743, %v1827
        %v1829 = vpop.f32.mrf.mxu0
        %v1830 = vpop.f32.mrf.mxu0
        %v1831 = vadd.f32 %v1743, %v1830
        %v1832 = vpop.f32.mrf.mxu0
        %1833 = vdwg.mxu0
        %v1834 = vadd.f32 %v1828, %v1649
        %v1835 = vadd.f32 %v1831, %v1650
        %v1836 = vld [vmem:[%s622] sm:$0x1]
        %v1837 = vld [vmem:[%s625] sm:$0x1]
        %v1838 = vsel %vm711, %v1834, 0.0
        %1839 = vadd.xlane.f32.xlu0 %v1838
        %v1840 = vpop.xlane.xlu0 %1839
        %v1841 = vsel %vm711, %v1835, 0.0
        %1842 = vadd.xlane.f32.xlu0 %v1841
        %v1843 = vpop.xlane.xlu0 %1842
        %v1844 = vmul.f32 %v1840, %v1614
        %v1845 = vmul.f32 %v1843, %v1614
        %v1846 = vsub.f32 %v1834, %v1844
        %v1847 = vsub.f32 %v1835, %v1845
        %v1848 = vmul.f32 %v1846, %v1846
        %v1849 = vmul.f32 %v1847, %v1847
        %v1850 = vsel %vm711, %v1848, 0.0
        %1851 = vadd.xlane.f32.xlu0 %v1850
        %v1852 = vpop.xlane.xlu0 %1851
        %v1853 = vsel %vm711, %v1849, 0.0
        %1854 = vadd.xlane.f32.xlu0 %v1853
        %v1855 = vpop.xlane.xlu0 %1854
        %v1856 = vmul.f32 %v1852, %v1614
        %v1857 = vmul.f32 %v1855, %v1614
        %v1858 = vadd.f32 %v1856, 1e-05
        %v1859 = vadd.f32 %v1857, 1e-05
        %v1860 = vrsqrt.pop %v1858
        %v1861 = vrsqrt.pop %v1859
        %v1862 = vmul.f32 %v1846, %v1860
        %v1863 = vmul.f32 %v1847, %v1861
        %v1865 = vlaneseq
        %v1866 = vshrl.u32 %v1865, 7
        %v1867 = vsub.s32 0, %v1866
        %v1868 = vrot.slane %v1836, %v1867
        %v1870 = vmul.f32 %v1862, %v1868
        %v1871 = vmul.f32 %v1863, %v1868
        %v1873 = vlaneseq
        %v1874 = vshrl.u32 %v1873, 7
        %v1875 = vsub.s32 0, %v1874
        %v1876 = vrot.slane %v1837, %v1875
        %v1878 = vadd.f32 %v1870, %v1876
        %v1879 = vadd.f32 %v1871, %v1876
        %1880 = vst.msk [vmem:[#allocation2] sm:$0xff] %vm711, %v1878
        %1881 = vst.msk [vmem:[#allocation2 + $0x8] sm:$0xff] %vm711, %v1879
        %p1882 = scmp.eq.s32.totalorder %s30, 1
        // Predicated region
        $region77: #{tpu_custom_call.1} parent=71 // pred_check
          %p1883 = pneg %p1882
        $region78: #{tpu_custom_call.1} parent=71 // pred_check_branch
          %1885 = sbr.rel (%p1883) target = $region80
        $region79: #{tpu_custom_call.1} parent=71 // pred_region
          %1886 = vst.msk [vmem:[#allocation3] sm:$0xff] %vm711, %v1878
          %1887 = vst.msk [vmem:[#allocation3 + $0x8] sm:$0xff] %vm711, %v1879
        $region80: #{tpu_custom_call.1} parent=71 // pred_fallthru
          _
        // Predicated region
        $region81: #{tpu_custom_call.1} parent=71 // pred_check
          %p1888 = pneg %p388
        $region82: #{tpu_custom_call.1} parent=71 // pred_check_branch
          %1890 = sbr.rel (%p1888) target = $region84
        $region83: #{tpu_custom_call.1} parent=71 // pred_region
          %s1891 = smul.u32 2, %s29
          %s1893 = ssub.s32 256, 256
          %1894 = vsyncadd [#allocation4], %s1893
          %s1895 = smul.addr %s1891, 128
          %s1896 = scalar_lea.hbm %s13, %s1895
          %s1897 = sshll.u32 [#allocation3], 4
          %s1898 = int_to_ptr.vmem [resolvable:$true] %s1897
          %1903 = dma.vmem_to_hbm [thread:$0]  %s1898, 256, %s1896, [#allocation4], 128, 128, 8
        $region84: #{tpu_custom_call.1} parent=71 // pred_fallthru
          _
        // Predicated region
        $region85: #{tpu_custom_call.1} parent=71 // pred_check
          %p1904 = pneg %p388
        $region86: #{tpu_custom_call.1} parent=71 // pred_check_branch
          %1906 = sbr.rel (%p1904) target = $region88
        $region87: #{tpu_custom_call.1} parent=71 // pred_region
          %1907 = dma.done [#allocation4], 256
        $region88: #{tpu_custom_call.1} parent=71 // pred_fallthru
          _
      $region72: #{tpu_custom_call.1} parent=5 // pred_fallthru
        _
      %p1908 = scmp.le.s32.totalorder 2, %s20
      // Predicated region
      $region89: #{tpu_custom_call.1} parent=5 // pred_check
        %p1909 = pneg %p1908
      $region90: #{tpu_custom_call.1} parent=5 // pred_check_branch
        %1911 = sbr.rel (%p1909) target = $region92
      $region91: #{tpu_custom_call.1} parent=5 // pred_region
        %s1912 = ssub.s32 %s20, 2
      $region92: #{tpu_custom_call.1} parent=5 // pred_fallthru
        _
    $region6: #{tpu_custom_call.1} parent=1 // loop_footer
      %s24 = sadd.s32 1, %s20
    $region7: #{tpu_custom_call.1} parent=1 // loop_footer_branch
      %19 = sbr.rel target = $region3
    $region8: #{tpu_custom_call.1} parent=1 // loop_exit
      _
    %1913 = vsyncpa [#allocation4], 1
    %s1914 = scalar_lea.sflag [#allocation4], 1
    %1915 = vsyncpa %s1914, 1

</llo_original>
